<compile_context>
chip_gen: v6e
topology: v6e:2x2x1
jax: 0.10.0
libtpu: 0.0.40
codegen_flags: <defaults>
</compile_context>

<pallas_src>
from functools import partial

import jax
import jax.numpy as jnp
from jax.experimental import pallas as pl
from jax.experimental.pallas import tpu as pltpu

BF16 = jnp.bfloat16


# ----------------------------------------------------------------------------- utils
def _device_kind():
    try:
        return jax.devices()[0].device_kind.lower()
    except Exception:
        return ""


# v6e/v7x MXU is 256 wide -> 256-wide output tiles; v5e MXU is 128 wide.
_TN_WIDE = 128 if "v5" in _device_kind() else 256


def _round_up(x, m):
    return (x + m - 1) // m * m


def _make_divisible(v, divisor=8, min_value=None):
    if min_value is None:
        min_value = divisor
    new_v = max(min_value, int(v + divisor / 2) // divisor * divisor)
    if new_v < 0.9 * v:
        new_v += divisor
    return new_v


def _apply_act(y, act):
    if act == "relu":
        return jnp.maximum(y, 0.0)
    if act == "relu6":
        return jnp.clip(y, 0.0, 6.0)
    if act == "hardswish":
        return y * jnp.clip(y + 3.0, 0.0, 6.0) * (1.0 / 6.0)
    if act == "hardsigmoid":
        return jnp.clip(y + 3.0, 0.0, 6.0) * (1.0 / 6.0)
    return y


def _pick_tm(M):
    if M >= 2048:
        return 512
    if M >= 512:
        return 256
    if M >= 128:
        return 128
    return _round_up(max(M, 8), 8)


def _pick_tn(N):
    if N < 128:
        return N
    if N < 256:
        return 128
    return _TN_WIDE


def _pick_chid_tile(chid, cap=768):
    """Largest divisor of chid <= cap, preferring lane-aligned multiples of 128."""
    if chid <= cap:
        return chid
    best128 = best8 = best = 1
    for t in range(1, cap + 1):
        if chid % t == 0:
            best = t
            if t % 8 == 0:
                best8 = t
            if t % 128 == 0:
                best128 = t
    if best128 > 1:
        return best128
    return best8 if best8 > 1 else best


# ------------------------------------------------------------------- fused GEMM kernel
def _make_gemm_kernel(act):
    def kernel(x_ref, w_ref, b_ref, o_ref):
        y = jnp.dot(x_ref[...], w_ref[...], preferred_element_type=jnp.float32)
        y = y + b_ref[...]
        o_ref[...] = _apply_act(y, act).astype(o_ref.dtype)
    return kernel


@partial(jax.jit, static_argnames=("act",))
def gemm_bias_act(x, w, b, *, act="none"):
    """y[M,N] = act(x[M,K] @ w[K,N] + b[N]).  bf16 operands, f32 accumulate, bf16 out."""
    M, K = x.shape
    _, N = w.shape
    x = x.astype(BF16)
    w = w.astype(BF16)

    TM = _pick_tm(M)
    if K >= 2048:                       # cap x-block for very wide contractions
        TM = min(TM, 256)
    if M < TM:                          # only tiny shapes (e.g. SE with M=2) pay a row pad
        x = jnp.pad(x, ((0, TM - M), (0, 0)))
        M_arr = TM
    else:
        M_arr = M
    TN = _pick_tn(N)

    grid = (pl.cdiv(M_arr, TM), pl.cdiv(N, TN))
    bias2 = b.reshape(1, N).astype(jnp.float32)

    out = pl.pallas_call(
        _make_gemm_kernel(act),
        grid=grid,
        in_specs=[
            pl.BlockSpec((TM, K), lambda i, j: (i, 0)),
            pl.BlockSpec((K, TN), lambda i, j: (0, j)),
            pl.BlockSpec((1, TN), lambda i, j: (0, j)),
        ],
        out_specs=pl.BlockSpec((TM, TN), lambda i, j: (i, j)),
        out_shape=jax.ShapeDtypeStruct((M_arr, N), BF16),
        compiler_params=pltpu.CompilerParams(
            dimension_semantics=("parallel", "parallel")),
    )(x, w, bias2)
    return out[:M] if M_arr != M else out


# ------------------------------------------- depthwise conv, stride 1: in-kernel tap gather
def _make_dw_s1_kernel(act, k, H, W):
    k2 = k * k

    def kernel(xp_ref, w_ref, b_ref, o_ref):
        w = w_ref[...].astype(jnp.float32)                       # (k2, 1, C)
        acc = xp_ref[0:1, 0:H, 0:W, :].astype(jnp.float32) * w[0]
        for t in range(1, k2):                                   # local value accumulation
            di, dj = t // k, t % k
            acc = acc + xp_ref[0:1, di:di + H, dj:dj + W, :].astype(jnp.float32) * w[t]
        o_ref[...] = _apply_act(acc + b_ref[...], act).astype(o_ref.dtype)

    return kernel


@partial(jax.jit, static_argnames=("k", "act"))
def dwconv_s1(x_nhwc, w_taps, b, *, k, act):
    """Stride-1 depthwise kxk conv; taps gathered in-kernel from a halo-padded input."""
    N, H, W, C = x_nhwc.shape
    pad = (k - 1) // 2
    xp = jnp.pad(x_nhwc.astype(BF16), ((0, 0), (pad, pad), (pad, pad), (0, 0)))
    Hp, Wp = H + 2 * pad, W + 2 * pad
    return pl.pallas_call(
        _make_dw_s1_kernel(act, k, H, W),
        grid=(N,),
        in_specs=[
            pl.BlockSpec((1, Hp, Wp, C), lambda n: (n, 0, 0, 0)),
            pl.BlockSpec((k * k, 1, C), lambda n: (0, 0, 0)),
            pl.BlockSpec((1, C), lambda n: (0, 0)),
        ],
        out_specs=pl.BlockSpec((1, H, W, C), lambda n: (n, 0, 0, 0)),
        out_shape=jax.ShapeDtypeStruct((N, H, W, C), BF16),
        compiler_params=pltpu.CompilerParams(dimension_semantics=("parallel",)),
    )(xp, w_taps, b)


# ------------------------------------------- depthwise conv, stride 2: tap-stack path
def _make_dw_taps_kernel(act):
    def kernel(t_ref, w_ref, b_ref, o_ref):
        x = t_ref[...].astype(jnp.float32)          # (k2, TM, TC)
        w = w_ref[...].astype(jnp.float32)          # (k2, 1, TC)
        y = jnp.sum(x * w, axis=0) + b_ref[...]
        o_ref[...] = _apply_act(y, act).astype(o_ref.dtype)
    return kernel


@partial(jax.jit, static_argnames=("k", "act"))
def dwconv_s2(x_nhwc, w_taps, b, *, k, act):
    # TODO(synk): stride-2 tap stack still materialized by XLA glue (only 4 small layers).
    stride = 2
    N, H, W, C = x_nhwc.shape
    pad = (k - 1) // 2
    Ho = (H + 2 * pad - k) // stride + 1
    Wo = (W + 2 * pad - k) // stride + 1

    xp = jnp.pad(x_nhwc.astype(BF16), ((0, 0), (pad, pad), (pad, pad), (0, 0)))
    taps = jnp.stack(
        [xp[:, di:di + stride * (Ho - 1) + 1:stride,
            dj:dj + stride * (Wo - 1) + 1:stride, :]
         for di in range(k) for dj in range(k)],
        axis=0,
    ).reshape(k * k, N * Ho * Wo, C)

    M = N * Ho * Wo
    TM = min(_pick_tm(M), 512 if k == 3 else 128)
    if M < TM:
        taps = jnp.pad(taps, ((0, 0), (0, TM - M), (0, 0)))
        M_arr = TM
    else:
        M_arr = M
    TC = C if C < 128 else 128
    grid = (pl.cdiv(M_arr, TM), pl.cdiv(C, TC))

    out = pl.pallas_call(
        _make_dw_taps_kernel(act),
        grid=grid,
        in_specs=[
            pl.BlockSpec((k * k, TM, TC), lambda i, j: (0, i, j)),
            pl.BlockSpec((k * k, 1, TC), lambda i, j: (0, 0, j)),
            pl.BlockSpec((1, TC), lambda i, j: (0, j)),
        ],
        out_specs=pl.BlockSpec((TM, TC), lambda i, j: (i, j)),
        out_shape=jax.ShapeDtypeStruct((M_arr, C), BF16),
        compiler_params=pltpu.CompilerParams(
            dimension_semantics=("parallel", "parallel")),
    )(taps, w_taps, b)
    out = out[:M] if M_arr != M else out
    return out.reshape(N, Ho, Wo, C)


def dwconv_bn_act(x_nhwc, w_taps, b, *, k, stride, act):
    if stride == 1:
        return dwconv_s1(x_nhwc, w_taps, b, k=k, act=act)
    return dwconv_s2(x_nhwc, w_taps, b, k=k, act=act)


# -------------------------------------- fully fused InvertedResidual (single pallas_call)
# grid = (batch N  [parallel],  hidden-channel tiles  [arbitrary / reduction])
def _make_fused_ir_kernel(act, use_res, H, W):
    HW = H * W

    def kernel(x_ref, we_ref, be_ref, wd_ref, bd_ref, wp_ref, bp_ref, o_ref,
               acc_ref, hid_ref):
        kstep = pl.program_id(1)
        Cin = x_ref.shape[3]
        TC = we_ref.shape[1]
        Cout = wp_ref.shape[1]

        @pl.when(kstep == 0)
        def _():
            acc_ref[...] = jnp.zeros_like(acc_ref)

        # 1x1 expand (this hidden-channel tile) + BN shift + act
        xr = x_ref[...].reshape(HW, Cin)
        h = jnp.dot(xr, we_ref[...], preferred_element_type=jnp.float32) + be_ref[...]
        h = _apply_act(h, act)

        # depthwise 3x3 (stride 1): bf16 halo scratch, border strips zeroed, interior
        # written once; the 9-tap accumulation happens in a local value (no scratch RMW).
        zrow = jnp.zeros((1, W + 2, TC), dtype=hid_ref.dtype)
        zcol = jnp.zeros((H + 2, 1, TC), dtype=hid_ref.dtype)
        hid_ref[0:1, :, :] = zrow
        hid_ref[H + 1:H + 2, :, :] = zrow
        hid_ref[:, 0:1, :] = zcol
        hid_ref[:, W + 1:W + 2, :] = zcol
        hid_ref[1:H + 1, 1:W + 1, :] = h.reshape(H, W, TC).astype(hid_ref.dtype)

        wd = wd_ref[...].astype(jnp.float32)                    # (9, 1, TC)
        dw = hid_ref[0:H, 0:W, :].astype(jnp.float32) * wd[0]
        for t in range(1, 9):
            di, dj = t // 3, t % 3
            dw = dw + hid_ref[di:di + H, dj:dj + W, :].astype(jnp.float32) * wd[t]
        dw = _apply_act(dw + bd_ref[...], act)

        # partial 1x1 projection for this channel tile, accumulated across the grid
        acc_ref[...] += jnp.dot(dw.reshape(HW, TC).astype(BF16), wp_ref[...],
                                preferred_element_type=jnp.float32)

        @pl.when(kstep == pl.num_programs(1) - 1)
        def _():
            out = acc_ref[...] + bp_ref[...]
            if use_res:
                out = out + xr.astype(jnp.float32)
            o_ref[...] = out.reshape(1, H, W, Cout).astype(o_ref.dtype)

    return kernel


@partial(jax.jit, static_argnames=("act", "use_res", "tc"))
def _fused_ir_call(x, we, be, wd, bd, wp, bp, *, act, use_res, tc):
    N, H, W, Cin = x.shape
    Chid = we.shape[1]
    Cout = wp.shape[1]
    assert Chid % tc == 0
    grid = (N, Chid // tc)
    return pl.pallas_call(
        _make_fused_ir_kernel(act, use_res, H, W),
        grid=grid,
        in_specs=[
            pl.BlockSpec((1, H, W, Cin), lambda n, k: (n, 0, 0, 0)),
            pl.BlockSpec((Cin, tc), lambda n, k: (0, k)),
            pl.BlockSpec((1, tc), lambda n, k: (0, k)),
            pl.BlockSpec((9, 1, tc), lambda n, k: (0, 0, k)),
            pl.BlockSpec((1, tc), lambda n, k: (0, k)),
            pl.BlockSpec((tc, Cout), lambda n, k: (k, 0)),
            pl.BlockSpec((1, Cout), lambda n, k: (0, 0)),
        ],
        out_specs=pl.BlockSpec((1, H, W, Cout), lambda n, k: (n, 0, 0, 0)),
        out_shape=jax.ShapeDtypeStruct((N, H, W, Cout), BF16),
        scratch_shapes=[
            pltpu.VMEM((H * W, Cout), jnp.float32),    # projection accumulator
            pltpu.VMEM((H + 2, W + 2, tc), BF16),      # hidden channel-tile + zero halo
        ],
        compiler_params=pltpu.CompilerParams(
            dimension_semantics=("parallel", "arbitrary")),
    )(x.astype(BF16), we, be, wd, bd, wp, bp)


def fused_inverted_residual(x_nhwc, p):
    return _fused_ir_call(x_nhwc, p["we"], p["be"], p["wd"], p["bd"],
                          p["wp"], p["bp"], act=p["act"], use_res=p["use_res"],
                          tc=p["tc"])


# -------------------------------------------------------------------- conv via im2col
def _extract_patches(x, k, stride, pad):
    N, H, W, C = x.shape
    xp = jnp.pad(x.astype(BF16), ((0, 0), (pad, pad), (pad, pad), (0, 0)))
    Ho = (H + 2 * pad - k) // stride + 1
    Wo = (W + 2 * pad - k) // stride + 1
    cols = [xp[:, di:di + stride * (Ho - 1) + 1:stride,
               dj:dj + stride * (Wo - 1) + 1:stride, :]
            for di in range(k) for dj in range(k)]
    patches = jnp.stack(cols, axis=3)                # (N, Ho, Wo, k*k, C)
    return patches.reshape(N * Ho * Wo, k * k * C), (N, Ho, Wo)


def conv2d(x_nhwc, p, *, stride=1, pad=0, act="none"):
    k = p["k"]
    N = x_nhwc.shape[0]
    if k == 1 and stride == 1 and pad == 0:
        _, H, W, C = x_nhwc.shape
        patches, Ho, Wo = x_nhwc.reshape(N * H * W, C), H, W
    else:
        patches, (_, Ho, Wo) = _extract_patches(x_nhwc, k, stride, pad)
    y = gemm_bias_act(patches, p["w"], p["b"], act=act)
    return y.reshape(N, Ho, Wo, p["cout"])


# ------------------------------------------------------------------- parameter init
class Init:
    """Deterministic synthetic parameter generator (stands in for checkpoint load)."""

    def __init__(self, seed):
        self.key = jax.random.PRNGKey(seed)

    def _n(self):
        self.key, sub = jax.random.split(self.key)
        return sub

    def normal(self, shape, std=0.05):
        return std * jax.random.normal(self._n(), shape, jnp.float32)

    def bn(self, c, eps=1e-5):
        gamma = 1.0 + 0.1 * jax.random.normal(self._n(), (c,), jnp.float32)
        beta = 0.1 * jax.random.normal(self._n(), (c,), jnp.float32)
        mean = 0.1 * jax.random.normal(self._n(), (c,), jnp.float32)
        var = 1.0 + 0.1 * jax.random.uniform(self._n(), (c,), jnp.float32)
        scale = gamma / jnp.sqrt(var + eps)
        shift = beta - mean * scale
        return scale, shift

    def bias(self, c):
        return 0.1 * jax.random.normal(self._n(), (c,), jnp.float32)


def conv_gemm_params(ini, k, cin, cout, *, bn=True):
    w = ini.normal((k, k, cin, cout))                 # HWIO
    if bn:
        scale, shift = ini.bn(cout)
        w = w * scale                                 # fold BN scale into the weight
        b = shift
    else:
        b = ini.bias(cout)
    return {"w": w.reshape(k * k * cin, cout).astype(BF16),
            "b": b.astype(jnp.float32), "k": k, "cin": cin, "cout": cout}


def dw_params(ini, k, c):
    w = ini.normal((k, k, c))
    scale, shift = ini.bn(c)
    return {"w": (w * scale).reshape(k * k, 1, c).astype(BF16),
            "b": shift.reshape(1, c).astype(jnp.float32)}


def fused_ir_params(ini, cin, chid, cout, act, cin_pad=None):
    cin_w = cin if cin_pad is None else cin_pad       # padded input channels read zeros
    we = ini.normal((cin_w, chid)); se_, be = ini.bn(chid)
    wd = ini.normal((3, 3, chid)); sd, bd = ini.bn(chid)
    wp = ini.normal((chid, cout)); sp, bp = ini.bn(cout)
    return {"we": (we * se_).astype(BF16), "be": be.reshape(1, chid).astype(jnp.float32),
            "wd": (wd * sd).reshape(9, 1, chid).astype(BF16),
            "bd": bd.reshape(1, chid).astype(jnp.float32),
            "wp": (wp * sp).astype(BF16), "bp": bp.reshape(1, cout).astype(jnp.float32),
            "act": act, "use_res": cin == cout, "tc": _pick_chid_tile(chid)}


def backbone_ir_params(ini, cfg):
    cin, k, chid, cout, use_se, act, stride = cfg
    p = {"cfg": cfg}
    if chid != cin:
        p["expand"] = conv_gemm_params(ini, 1, cin, chid)
    p["dw"] = dw_params(ini, k, chid)
    if use_se:
        csq = _make_divisible(chid // 4, 8)
        p["se"] = {"w1": ini.normal((chid, csq)).astype(BF16), "b1": ini.bias(csq),
                   "w2": ini.normal((csq, chid)).astype(BF16), "b2": ini.bias(chid)}
    p["proj"] = conv_gemm_params(ini, 1, chid, cout)
    return p


# ---------------------------------------------------------------- InvertedResidual fwd
def _fusable(cfg):
    cin, k, chid, cout, use_se, act, stride = cfg
    return stride == 1 and k == 3 and not use_se and chid != cin


def make_block(ini, cfg):
    if _fusable(cfg):
        cin, k, chid, cout, use_se, act, stride = cfg
        return ("fused", fused_ir_params(ini, cin, chid, cout, act))
    return ("plain", backbone_ir_params(ini, cfg))


def make_ir6(ini, cin, cout, act="relu6", cin_pad=None):
    """MobileNetV2-style InvertedResidual(stride=1, expand_ratio=6)."""
    chid = int(round(cin * 6))
    return ("fused", fused_ir_params(ini, cin, chid, cout, act, cin_pad=cin_pad))


def plain_ir_forward(x, p):
    cin, k, chid, cout, use_se, act, stride = p["cfg"]
    h = x
    if "expand" in p:
        h = conv2d(h, p["expand"], act=act)
    h = dwconv_bn_act(h, p["dw"]["w"], p["dw"]["b"], k=k, stride=stride, act=act)
    if "se" in p:
        # TODO(synk): SE squeeze (global avg-pool) and channel rescale kept in plain JAX
        # (tiny (N, C) vectors); the two FCs use the Pallas GEMM kernel.
        se = p["se"]
        pooled = jnp.mean(h.astype(jnp.float32), axis=(1, 2)).astype(BF16)
        s = gemm_bias_act(pooled, se["w1"], se["b1"], act="relu")
        s = gemm_bias_act(s, se["w2"], se["b2"], act="hardsigmoid")
        h = h * s[:, None, None, :].astype(BF16)
    out = conv2d(h, p["proj"], act="none")
    if stride == 1 and cin == cout:
        out = out + x
    return out


def ir_forward(x, blk):
    kind, p = blk
    if kind == "fused":
        return fused_inverted_residual(x, p)
    return plain_ir_forward(x, p)


# ------------------------------------------------------------- MobileNetV3-Large backbone
# (cin, kernel, expanded, cout, use_se, activation, stride)
_MBV3_LARGE_CFG = [
    (16,  3, 16,  16,  False, "relu",      1),
    (16,  3, 64,  24,  False, "relu",      2),
    (24,  3, 72,  24,  False, "relu",      1),
    (24,  5, 72,  40,  True,  "relu",      2),
    (40,  5, 120, 40,  True,  "relu",      1),
    (40,  5, 120, 40,  True,  "relu",      1),
    (40,  3, 240, 80,  False, "hardswish", 2),
    (80,  3, 200, 80,  False, "hardswish", 1),
    (80,  3, 184, 80,  False, "hardswish", 1),
    (80,  3, 184, 80,  False, "hardswish", 1),
    (80,  3, 480, 112, True,  "hardswish", 1),
    (112, 3, 672, 112, True,  "hardswish", 1),
    (112, 5, 672, 160, True,  "hardswish", 2),
    (160, 5, 960, 160, True,  "hardswish", 1),
    (160, 5, 960, 160, True,  "hardswish", 1),
]


def init_backbone(ini):
    return {"stem": conv_gemm_params(ini, 3, 3, 16),
            "blocks": [make_block(ini, cfg) for cfg in _MBV3_LARGE_CFG],
            "last": conv_gemm_params(ini, 1, 160, 960)}


def backbone_forward(x, p):
    # TODO(synk): stem conv + block 0 could be fused into one call (launch-count lever).
    x = conv2d(x, p["stem"], stride=2, pad=1, act="hardswish")
    for blk in p["blocks"]:
        x = ir_forward(x, blk)
    return conv2d(x, p["last"], act="hardswish")


# ------------------------------------------------------------------------ upsample/heads
def init_upsample(ini):
    return {"ir44": make_ir6(ini, 960, 640),
            "ir55": make_ir6(ini, 640, 320),
            "ir56": make_ir6(ini, 320, 64),
            "conv": conv_gemm_params(ini, 3, 64, 64, bn=False)}


def upsample_forward(x, p):
    x = jnp.repeat(jnp.repeat(x, 2, axis=1), 2, axis=2)      # nearest 2x (tiny tensor)
    x = ir_forward(x, p["ir44"])
    x = jnp.repeat(jnp.repeat(x, 2, axis=1), 2, axis=2)      # nearest 2x
    x = ir_forward(x, p["ir55"])
    x = ir_forward(x, p["ir56"])
    return conv2d(x, p["conv"], stride=1, pad=0, act="none")  # 3x3, padding 0, bias


def init_head(ini, inputs, outputs, nb_layers, inputs_pad=None):
    blocks = [make_ir6(ini, inputs, 64, cin_pad=inputs_pad)]
    for _ in range(nb_layers - 1):
        blocks.append(make_ir6(ini, 64, 64))
    return {"blocks": blocks, "final": conv_gemm_params(ini, 3, 64, outputs, bn=False)}


def head_forward(x, p):
    for b in p["blocks"]:
        x = ir_forward(x, b)
    return conv2d(x, p["final"], stride=1, pad=1, act="none")


# ------------------------------------------------------------------------- full model
def init_params(seed=0, numBeliefMap=9, numAffinity=16):
    ini = Init(seed)
    nb = numBeliefMap
    na = (numBeliefMap - 1) * 2
    cat = 64 + nb + na                              # 89 channels
    cat_pad = _round_up(cat, 128)                   # lane-dense concat for the heads
    return {
        "cat": cat, "cat_pad": cat_pad,
        "backbone": init_backbone(ini),
        "upsample": init_upsample(ini),
        "head_0_beliefs": init_head(ini, 64, nb, 2),
        "head_0_aff": init_head(ini, 64, na, 3),
        "head_1_beliefs": init_head(ini, cat, nb, 3, inputs_pad=cat_pad),
        "head_1_aff": init_head(ini, cat, na, 2, inputs_pad=cat_pad),
        "head_2_beliefs": init_head(ini, cat, nb, 3, inputs_pad=cat_pad),
        "head_2_aff": init_head(ini, cat, na, 1, inputs_pad=cat_pad),
    }


def _concat_pad(tensors, pad_to):
    cat = jnp.concatenate([t.astype(BF16) for t in tensors], axis=-1)
    c = cat.shape[-1]
    if c < pad_to:   # zero channels multiply zero weight contributions -> math unchanged
        cat = jnp.pad(cat, ((0, 0), (0, 0), (0, 0), (0, pad_to - c)))
    return cat


def dope_mobilenetv3_forward(x_nchw, params):
    x = jnp.transpose(x_nchw, (0, 2, 3, 1)).astype(BF16)     # NCHW -> NHWC, bf16
    feats = backbone_forward(x, params["backbone"])
    up = upsample_forward(feats, params["upsample"])

    pad_to = params["cat_pad"]
    b0 = head_forward(up, params["head_0_beliefs"])
    a0 = head_forward(up, params["head_0_aff"])
    out0 = _concat_pad([up, b0, a0], pad_to)
    b1 = head_forward(out0, params["head_1_beliefs"])
    a1 = head_forward(out0, params["head_1_aff"])
    out1 = _concat_pad([up, b1, a1], pad_to)
    b2 = head_forward(out1, params["head_2_beliefs"])
    a2 = head_forward(out1, params["head_2_aff"])

    to_nchw = lambda t: jnp.transpose(t, (0, 3, 1, 2)).astype(jnp.float32)
    return ([to_nchw(b0), to_nchw(b1), to_nchw(b2)],
            [to_nchw(a0), to_nchw(a1), to_nchw(a2)])


# ------------------------------------------------------------------------------- main
if __name__ == "__main__":
    key = jax.random.PRNGKey(0)
    x = jax.random.normal(key, (2, 3, 64, 64), jnp.float32)   # NCHW input
    params = init_params(seed=0)

    beliefs, affs = dope_mobilenetv3_forward(x, params)
    for t in beliefs + affs:
        jax.block_until_ready(t)

    # 64x64 input -> backbone 2x2 -> upsample x4 -> 8x8 -> 3x3 conv (pad 0) -> 6x6 heads
    assert all(b.shape == (2, 9, 6, 6) for b in beliefs), [b.shape for b in beliefs]
    assert all(a.shape == (2, 16, 6, 6) for a in affs), [a.shape for a in affs]
    assert all(bool(jnp.isfinite(t).all()) for t in beliefs + affs)
    print("KERNEL_OK")
</pallas_src>

<mosaic_0001>
module attributes {stable_mosaic.version = 11 : i64} {
  func.func @kernel(%arg0: i32, %arg1: i32, %arg2: memref<512x27xbf16, #tpu.memory_space<vmem>>, %arg3: memref<27x16xbf16, #tpu.memory_space<vmem>>, %arg4: memref<1x16xf32, #tpu.memory_space<vmem>>, %arg5: memref<512x16xbf16, #tpu.memory_space<vmem>>) attributes {dimension_semantics = [#tpu.dimension_semantics<parallel>, #tpu.dimension_semantics<parallel>], iteration_bounds = array<i64: 4, 1>, scalar_prefetch = 0 : i64, scratch_operands = 0 : i64, tpu.core_type = #tpu.core_type<tc>, window_params = [{transform_indices = @transform_0, window_bounds = array<i64: 512, 27>}, {transform_indices = @transform_1, window_bounds = array<i64: 27, 16>}, {transform_indices = @transform_2, window_bounds = array<i64: 1, 16>}, {transform_indices = @transform_3, window_bounds = array<i64: 512, 16>}]} {
    %c0 = arith.constant 0 : index
    %c0_0 = arith.constant 0 : index
    %0 = vector.load %arg2[%c0, %c0_0] : memref<512x27xbf16, #tpu.memory_space<vmem>>, vector<512x27xbf16>
    %c0_1 = arith.constant 0 : index
    %c0_2 = arith.constant 0 : index
    %1 = vector.load %arg3[%c0_1, %c0_2] : memref<27x16xbf16, #tpu.memory_space<vmem>>, vector<27x16xbf16>
    %cst = arith.constant dense<0.000000e+00> : vector<512x16xf32>
    %2 = tpu.matmul %0, %1, %cst {dimension_numbers = #tpu.dot_dimension_numbers<[1], [0], [0], [1], [0, 0, 1, 1], [], []>} : vector<512x27xbf16>, vector<27x16xbf16>, vector<512x16xf32> -> vector<512x16xf32>
    %c0_3 = arith.constant 0 : index
    %c0_4 = arith.constant 0 : index
    %3 = vector.load %arg4[%c0_3, %c0_4] : memref<1x16xf32, #tpu.memory_space<vmem>>, vector<1x16xf32>
    %4 = vector.broadcast %3 : vector<1x16xf32> to vector<512x16xf32>
    %5 = arith.addf %2, %4 : vector<512x16xf32>
    %cst_5 = arith.constant 3.000000e+00 : f32
    %6 = vector.broadcast %cst_5 : f32 to vector<512x16xf32>
    %7 = arith.addf %5, %6 : vector<512x16xf32>
    %cst_6 = arith.constant 0.000000e+00 : f32
    %cst_7 = arith.constant 6.000000e+00 : f32
    %8 = vector.broadcast %cst_6 : f32 to vector<512x16xf32>
    %9 = arith.maximumf %8, %7 : vector<512x16xf32>
    %10 = vector.broadcast %cst_7 : f32 to vector<512x16xf32>
    %11 = arith.minimumf %10, %9 : vector<512x16xf32>
    %12 = arith.mulf %5, %11 : vector<512x16xf32>
    %cst_8 = arith.constant 0.166666672 : f32
    %13 = vector.broadcast %cst_8 : f32 to vector<512x16xf32>
    %14 = arith.mulf %12, %13 : vector<512x16xf32>
    %15 = arith.truncf %14 : vector<512x16xf32> to vector<512x16xbf16>
    %c0_9 = arith.constant 0 : index
    %c0_10 = arith.constant 0 : index
    %16 = vector.load %arg5[%c0_9, %c0_10] : memref<512x16xbf16, #tpu.memory_space<vmem>>, vector<512x16xbf16>
    tpu.vector_store %arg5[%c0_9, %c0_10], %15 {strides = array<i32>} : memref<512x16xbf16, #tpu.memory_space<vmem>>, vector<512x16xbf16>,
    return
  }
  func.func @transform_0(%arg0: i32, %arg1: i32) -> (i32, i32) {
    %c0_i32 = arith.constant 0 : i32
    %c0_i32_0 = arith.constant 0 : i32
    return %arg0, %c0_i32 : i32, i32
  }
  func.func @transform_1(%arg0: i32, %arg1: i32) -> (i32, i32) {
    %c0_i32 = arith.constant 0 : i32
    %c0_i32_0 = arith.constant 0 : i32
    return %c0_i32, %arg1 : i32, i32
  }
  func.func @transform_2(%arg0: i32, %arg1: i32) -> (i32, i32) {
    %c0_i32 = arith.constant 0 : i32
    %c0_i32_0 = arith.constant 0 : i32
    return %c0_i32, %arg1 : i32, i32
  }
  func.func @transform_3(%arg0: i32, %arg1: i32) -> (i32, i32) {
    %c0_i32 = arith.constant 0 : i32
    return %arg0, %arg1 : i32, i32
  }
}

</mosaic_0001>

<llo_original>
// kernel: gemm_bias_act.1
$region0: #{gemm_bias_act.1}
  #allocation0 [shape = 'u32[]', space=smem, size = 0x4, offset = 0x4, fixed_abs, tag = 'smem constant byte address 0x4 - core index']
  #allocation1 [shape = 'u32[144,128]{1,0:T(1,128)}', space=vmem, size = 0x12000, scoped, tag = 'internal scratch']
  %s0 = inlined_call_operand.vmem [shape: bf16[2048,27], index: 0, kind: input, shape index: {}]
  %s1 = inlined_call_operand.vmem [shape: bf16[27,16], index: 1, kind: input, shape index: {}]
  %s2 = inlined_call_operand.vmem [shape: f32[1,16], index: 2, kind: input, shape index: {}]
  %s3 = inlined_call_operand.vmem [shape: bf16[2048,16], index: 3, kind: output, shape index: {}]
  %s4 = sld [smem:[#allocation0]]
  $region45: #{gemm_bias_act.1} parent=0
    _
  %s6 = ssub.s32 1, %s4
  %s7 = scalar_select 0, %s6, %s4
  loop: start=0, step=1, limit=6
  $region2: #{gemm_bias_act.1} parent=0 // loop_pre_header
    _
  $region3: #{gemm_bias_act.1} parent=0 // loop_header
    %s9 = sphi 0, %s13
    %p10 = scmp.ge.s32.totalorder %s9, 6
    %s16 = sphi 0, %s28
    %s17 = sphi 0, %s24
    %s18 = sphi 0, %s16
    %s19 = sphi 0, %s17
    %s20 = sphi 0, %s18
    %s21 = sphi 0, %s19
    %s31 = sphi 0, %s33
    %s34 = sphi 0, %s31
    %s35 = sphi 0, %s34
    %s51 = sphi 0, %s35
    %s57 = sphi 0, %s59
    %s60 = sphi 0, %s57
    %s61 = sphi 0, %s60
    %s77 = sphi 0, %s61
    %s83 = sphi 0, %s85
    %s86 = sphi 0, %s83
    %s87 = sphi 0, %s86
    %s103 = sphi 0, %s87
    %s111 = sphi 0, %s113
    %s114 = sphi 0, %s111
    %s115 = sphi 0, %s114
    %s131 = sphi 0, %s115
  $region4: #{gemm_bias_act.1} parent=0 // loop_header_branch
    %12 = sbr.rel (%p10) target = $region8
  $region5: #{gemm_bias_act.1} parent=0 // loop_body
    %s14 = ssub.s32 %s9, 1
    %s15 = ssub.s32 %s9, 2
    %s22 = sadd.s32 1, %s17
    %p23 = scmp.ge.s32.totalorder %s22, 1
    %s24 = scalar_select %p23, 0, %s22
    %s25 = sadd.s32 1, %s16
    %s26 = scalar_select %p23, %s25, %s16
    %p27 = scmp.ge.s32.totalorder %s26, 4
    %s28 = scalar_select %p27, 0, %s26
    %s29 = ssub.s32 %s16, %s28
    %p30 = scmp.eq.s32.totalorder %s29, 0
    %s32 = sadd.s32 %s31, 1
    %s33 = scalar_select %p30, %s31, %s32
    %p36 = pneg %p30
    %p37 = scmp.eq.s32.totalorder %s9, 3
    %p38 = por %p36, %p37
    %p39 = scmp.ne.s32.totalorder %s31, %s34
    %p40 = scmp.eq.s32.totalorder %s9, 0
    %p41 = por %p39, %p40
    %p42 = scmp.ne.s32.totalorder %s31, %s34
    %p43 = scmp.eq.s32.totalorder %s14, 3
    %p44 = por %p42, %p43
    %p45 = scmp.ne.s32.totalorder %s34, %s35
    %p46 = scmp.eq.s32.totalorder %s14, 0
    %p47 = por %p45, %p46
    %p48 = scmp.ne.s32.totalorder %s34, %s35
    %p49 = scmp.eq.s32.totalorder %s15, 3
    %p50 = por %p48, %p49
    %p52 = scmp.ne.s32.totalorder %s35, %s51
    %p53 = scmp.eq.s32.totalorder %s15, 0
    %p54 = por %p52, %p53
    %s55 = ssub.s32 %s17, %s24
    %p56 = scmp.eq.s32.totalorder %s55, 0
    %s58 = sadd.s32 %s57, 1
    %s59 = scalar_select %p56, %s57, %s58
    %p62 = pneg %p56
    %p63 = scmp.eq.s32.totalorder %s9, 3
    %p64 = por %p62, %p63
    %p65 = scmp.ne.s32.totalorder %s57, %s60
    %p66 = scmp.eq.s32.totalorder %s9, 0
    %p67 = por %p65, %p66
    %p68 = scmp.ne.s32.totalorder %s57, %s60
    %p69 = scmp.eq.s32.totalorder %s14, 3
    %p70 = por %p68, %p69
    %p71 = scmp.ne.s32.totalorder %s60, %s61
    %p72 = scmp.eq.s32.totalorder %s14, 0
    %p73 = por %p71, %p72
    %p74 = scmp.ne.s32.totalorder %s60, %s61
    %p75 = scmp.eq.s32.totalorder %s15, 3
    %p76 = por %p74, %p75
    %p78 = scmp.ne.s32.totalorder %s61, %s77
    %p79 = scmp.eq.s32.totalorder %s15, 0
    %p80 = por %p78, %p79
    %s81 = ssub.s32 %s17, %s24
    %p82 = scmp.eq.s32.totalorder %s81, 0
    %s84 = sadd.s32 %s83, 1
    %s85 = scalar_select %p82, %s83, %s84
    %p88 = pneg %p82
    %p89 = scmp.eq.s32.totalorder %s9, 3
    %p90 = por %p88, %p89
    %p91 = scmp.ne.s32.totalorder %s83, %s86
    %p92 = scmp.eq.s32.totalorder %s9, 0
    %p93 = por %p91, %p92
    %p94 = scmp.ne.s32.totalorder %s83, %s86
    %p95 = scmp.eq.s32.totalorder %s14, 3
    %p96 = por %p94, %p95
    %p97 = scmp.ne.s32.totalorder %s86, %s87
    %p98 = scmp.eq.s32.totalorder %s14, 0
    %p99 = por %p97, %p98
    %p100 = scmp.ne.s32.totalorder %s86, %s87
    %p101 = scmp.eq.s32.totalorder %s15, 3
    %p102 = por %p100, %p101
    %p104 = scmp.ne.s32.totalorder %s87, %s103
    %p105 = scmp.eq.s32.totalorder %s15, 0
    %p106 = por %p104, %p105
    %s107 = ssub.s32 %s16, %s28
    %s108 = ssub.s32 %s17, %s24
    %s109 = sor.u32 %s107, %s108
    %p110 = scmp.eq.s32.totalorder %s109, 0
    %s112 = sadd.s32 %s111, 1
    %s113 = scalar_select %p110, %s111, %s112
    %p116 = pneg %p110
    %p117 = scmp.eq.s32.totalorder %s9, 3
    %p118 = por %p116, %p117
    %p119 = scmp.ne.s32.totalorder %s111, %s114
    %p120 = scmp.eq.s32.totalorder %s9, 0
    %p121 = por %p119, %p120
    %p122 = scmp.ne.s32.totalorder %s111, %s114
    %p123 = scmp.eq.s32.totalorder %s14, 3
    %p124 = por %p122, %p123
    %p125 = scmp.ne.s32.totalorder %s114, %s115
    %p126 = scmp.eq.s32.totalorder %s14, 0
    %p127 = por %p125, %p126
    %p128 = scmp.ne.s32.totalorder %s114, %s115
    %p129 = scmp.eq.s32.totalorder %s15, 3
    %p130 = por %p128, %p129
    %p132 = scmp.ne.s32.totalorder %s115, %s131
    %p133 = scmp.eq.s32.totalorder %s15, 0
    %p134 = por %p132, %p133
    %p135 = scmp.le.s32.totalorder 1, %s9
    %p136 = scmp.lt.s32.totalorder %s9, 5
    %p137 = pnand %p135, %p136
    %p138 = pneg %p137
    // Predicated region
    $region9: #{gemm_bias_act.1} parent=5 // pred_check
      _
    $region10: #{gemm_bias_act.1} parent=5 // pred_check_branch
      %140 = sbr.rel (%p137) target = $region12
    $region11: #{gemm_bias_act.1} parent=5 // pred_region
      %s141 = ssub.s32 %s9, 1
      // Predicated region
      $region13: #{gemm_bias_act.1} parent=11 // pred_check
        %p142 = pneg %p73
      $region14: #{gemm_bias_act.1} parent=11 // pred_check_branch
        %144 = sbr.rel (%p142) target = $region16
      $region15: #{gemm_bias_act.1} parent=11 // pred_region
        %p145 = scmp.lt.s32.totalorder %s19, 0
        %s146 = scalar_select %p145, %s19, 0
        %s147 = smul.addr %s146, 4
        %s148 = scalar_lea.vmem %s1, %s147
      $region16: #{gemm_bias_act.1} parent=11 // pred_fallthru
        _
      // Predicated region
      $region17: #{gemm_bias_act.1} parent=11 // pred_check
        %p149 = pneg %p99
      $region18: #{gemm_bias_act.1} parent=11 // pred_check_branch
        %151 = sbr.rel (%p149) target = $region20
      $region19: #{gemm_bias_act.1} parent=11 // pred_region
        %p152 = scmp.lt.s32.totalorder %s19, 0
        %s153 = scalar_select %p152, %s19, 0
        %s154 = scalar_lea.vmem %s2, %s153
      $region20: #{gemm_bias_act.1} parent=11 // pred_fallthru
        _
    $region12: #{gemm_bias_act.1} parent=5 // pred_fallthru
      _
    %p155 = scmp.lt.s32.totalorder %s9, 4
    // Predicated region
    $region21: #{gemm_bias_act.1} parent=5 // pred_check
      %p156 = pneg %p155
    $region22: #{gemm_bias_act.1} parent=5 // pred_check_branch
      %158 = sbr.rel (%p156) target = $region24
    $region23: #{gemm_bias_act.1} parent=5 // pred_region
      // Predicated region
      $region25: #{gemm_bias_act.1} parent=23 // pred_check
        %p159 = pneg %p41
      $region26: #{gemm_bias_act.1} parent=23 // pred_check_branch
        %161 = sbr.rel (%p159) target = $region28
      $region27: #{gemm_bias_act.1} parent=23 // pred_region
        %s162 = smul.u32 64, %s16
        %p163 = scmp.lt.s32.totalorder %s162, 255
        %s164 = scalar_select %p163, %s162, 255
        %s165 = smul.addr %s164, 4
        %s166 = scalar_lea.vmem %s0, %s165
        %s167 = smul.u32 64, %s16
      $region28: #{gemm_bias_act.1} parent=23 // pred_fallthru
        _
    $region24: #{gemm_bias_act.1} parent=5 // pred_fallthru
      _
    %p168 = scmp.le.s32.totalorder 1, %s9
    %p169 = scmp.lt.s32.totalorder %s9, 5
    %p170 = pnand %p168, %p169
    %p171 = pneg %p170
    // Predicated region
    $region29: #{gemm_bias_act.1} parent=5 // pred_check
      _
    $region30: #{gemm_bias_act.1} parent=5 // pred_check_branch
      %173 = sbr.rel (%p170) target = $region32
    $region31: #{gemm_bias_act.1} parent=5 // pred_region
      %s174 = ssub.s32 %s9, 1
      %s175 = smul.u32 64, %s18
      %p176 = scmp.lt.s32.totalorder %s175, 255
      %s177 = scalar_select %p176, %s175, 255
      %s178 = smul.addr %s177, 4
      %s179 = scalar_lea.vmem %s0, %s178
      %p180 = pneg %p47
      %p181 = pneg %p44
      %p182 = scmp.lt.s32.totalorder %s19, 0
      %s183 = scalar_select %p182, %s19, 0
      %s184 = smul.addr %s183, 4
      %s185 = scalar_lea.vmem %s1, %s184
      %p186 = pneg %p73
      %p187 = pneg %p70
      %p188 = scmp.lt.s32.totalorder %s19, 0
      %s189 = scalar_select %p188, %s19, 0
      %s190 = scalar_lea.vmem %s2, %s189
      %p191 = pneg %p99
      %p192 = pneg %p96
      %p193 = pneg %p127
      %p194 = pneg %p124
      %s195 = smul.u32 64, %s18
      %p196 = scmp.lt.s32.totalorder %s195, 255
      %s197 = scalar_select %p196, %s195, 255
      %p198 = scmp.lt.s32.totalorder %s19, 0
      %s199 = scalar_select %p198, %s19, 0
      %s200 = sadd.s32 %s199, %s197
      %s201 = smul.addr %s200, 4
      %s202 = scalar_lea.vmem %s3, %s201
      %s203 = smul.u32 64, %s18
      %p204 = scmp.lt.s32.totalorder %s203, 255
      %s205 = scalar_select %p204, %s203, 255
      %s206 = smul.addr %s205, 4
      %s207 = scalar_lea.vmem %s0, %s206
      %s208 = smul.u32 64, %s18
      %p209 = scmp.lt.s32.totalorder %s19, 0
      %s210 = scalar_select %p209, %s19, 0
      %s211 = smul.addr %s210, 4
      %s212 = scalar_lea.vmem %s1, %s211
      %p213 = scmp.lt.s32.totalorder %s19, 0
      %s214 = scalar_select %p213, %s19, 0
      %s215 = scalar_lea.vmem %s2, %s214
      %s216 = smul.u32 64, %s18
      %p217 = scmp.lt.s32.totalorder %s216, 255
      %s218 = scalar_select %p217, %s216, 255
      %p219 = scmp.lt.s32.totalorder %s19, 0
      %s220 = scalar_select %p219, %s19, 0
      %s221 = sadd.s32 %s220, %s218
      %s222 = smul.addr %s221, 4
      %s223 = scalar_lea.vmem %s3, %s222
      %s224 = smul.u32 64, %s18
      %v226 = vld [vmem:[%s207] sm:$0xf]
      %v227 = vld [vmem:[%s207 + $0x4] sm:$0xf]
      %v228 = vld [vmem:[%s207 + $0x8] sm:$0xf]
      %v229 = vld [vmem:[%s207 + $0xc] sm:$0xf]
      %v230 = vld [vmem:[%s207 + $0x10] sm:$0xf]
      %v231 = vld [vmem:[%s207 + $0x14] sm:$0xf]
      %v232 = vld [vmem:[%s207 + $0x18] sm:$0xf]
      %v233 = vld [vmem:[%s207 + $0x1c] sm:$0xf]
      %v234 = vld [vmem:[%s207 + $0x20] sm:$0xf]
      %v235 = vld [vmem:[%s207 + $0x24] sm:$0xf]
      %v236 = vld [vmem:[%s207 + $0x28] sm:$0xf]
      %v237 = vld [vmem:[%s207 + $0x2c] sm:$0xf]
      %v238 = vld [vmem:[%s207 + $0x30] sm:$0xf]
      %v239 = vld [vmem:[%s207 + $0x34] sm:$0xf]
      %v240 = vld [vmem:[%s207 + $0x38] sm:$0xf]
      %v241 = vld [vmem:[%s207 + $0x3c] sm:$0xf]
      %v242 = vld [vmem:[%s207 + $0x40] sm:$0xf]
      %v243 = vld [vmem:[%s207 + $0x44] sm:$0xf]
      %v244 = vld [vmem:[%s207 + $0x48] sm:$0xf]
      %v245 = vld [vmem:[%s207 + $0x4c] sm:$0xf]
      %v246 = vld [vmem:[%s207 + $0x50] sm:$0xf]
      %v247 = vld [vmem:[%s207 + $0x54] sm:$0xf]
      %v248 = vld [vmem:[%s207 + $0x58] sm:$0xf]
      %v249 = vld [vmem:[%s207 + $0x5c] sm:$0xf]
      %v250 = vld [vmem:[%s207 + $0x60] sm:$0xf]
      %v251 = vld [vmem:[%s207 + $0x64] sm:$0xf]
      %v252 = vld [vmem:[%s207 + $0x68] sm:$0xf]
      %v253 = vld [vmem:[%s207 + $0x6c] sm:$0xf]
      %v254 = vld [vmem:[%s207 + $0x70] sm:$0xf]
      %v255 = vld [vmem:[%s207 + $0x74] sm:$0xf]
      %v256 = vld [vmem:[%s207 + $0x78] sm:$0xf]
      %v257 = vld [vmem:[%s207 + $0x7c] sm:$0xf]
      %v258 = vld [vmem:[%s207 + $0x80] sm:$0xf]
      %v259 = vld [vmem:[%s207 + $0x84] sm:$0xf]
      %v260 = vld [vmem:[%s207 + $0x88] sm:$0xf]
      %v261 = vld [vmem:[%s207 + $0x8c] sm:$0xf]
      %v262 = vld [vmem:[%s207 + $0x90] sm:$0xf]
      %v263 = vld [vmem:[%s207 + $0x94] sm:$0xf]
      %v264 = vld [vmem:[%s207 + $0x98] sm:$0xf]
      %v265 = vld [vmem:[%s207 + $0x9c] sm:$0xf]
      %v266 = vld [vmem:[%s207 + $0xa0] sm:$0xf]
      %v267 = vld [vmem:[%s207 + $0xa4] sm:$0xf]
      %v268 = vld [vmem:[%s207 + $0xa8] sm:$0xf]
      %v269 = vld [vmem:[%s207 + $0xac] sm:$0xf]
      %v270 = vld [vmem:[%s207 + $0xb0] sm:$0xf]
      %v271 = vld [vmem:[%s207 + $0xb4] sm:$0xf]
      %v272 = vld [vmem:[%s207 + $0xb8] sm:$0xf]
      %v273 = vld [vmem:[%s207 + $0xbc] sm:$0xf]
      %v274 = vld [vmem:[%s207 + $0xc0] sm:$0xf]
      %v275 = vld [vmem:[%s207 + $0xc4] sm:$0xf]
      %v276 = vld [vmem:[%s207 + $0xc8] sm:$0xf]
      %v277 = vld [vmem:[%s207 + $0xcc] sm:$0xf]
      %v278 = vld [vmem:[%s207 + $0xd0] sm:$0xf]
      %v279 = vld [vmem:[%s207 + $0xd4] sm:$0xf]
      %v280 = vld [vmem:[%s207 + $0xd8] sm:$0xf]
      %v281 = vld [vmem:[%s207 + $0xdc] sm:$0xf]
      %v282 = vld [vmem:[%s207 + $0xe0] sm:$0xf]
      %v283 = vld [vmem:[%s207 + $0xe4] sm:$0xf]
      %v284 = vld [vmem:[%s207 + $0xe8] sm:$0xf]
      %v285 = vld [vmem:[%s207 + $0xec] sm:$0xf]
      %v286 = vld [vmem:[%s207 + $0xf0] sm:$0xf]
      %v287 = vld [vmem:[%s207 + $0xf4] sm:$0xf]
      %v288 = vld [vmem:[%s207 + $0xf8] sm:$0xf]
      %v289 = vld [vmem:[%s207 + $0xfc] sm:$0xf]
      %v290 = vld [vmem:[%s212] sm:$0xf]
      %v291 = vld [vmem:[%s212 + $0x4] sm:$0xf]
      %v292 = vld [vmem:[%s212 + $0x8] sm:$0xf]
      %v293 = vld [vmem:[%s212 + $0xc] sm:$0x3]
      %v294 = vld [vmem:[%s215] sm:$0x1]
      %v296 = vlaneseq
      %v297 = vshrl.u32 %v296, 7
      %v298 = vsub.s32 0, %v297
      %v299 = vrot.slane %v294, %v298
      %v365 = vunpack.c.l.b16 %v226
      %v366 = vunpack.c.l.b16 %v227
      %v367 = vunpack.c.l.b16 %v228
      %v368 = vunpack.c.l.b16 %v229
      %v369 = vunpack.c.l.b16 %v230
      %v370 = vunpack.c.l.b16 %v231
      %v371 = vunpack.c.l.b16 %v232
      %v372 = vunpack.c.l.b16 %v233
      %v373 = vunpack.c.l.b16 %v234
      %v374 = vunpack.c.l.b16 %v235
      %v375 = vunpack.c.l.b16 %v236
      %v376 = vunpack.c.l.b16 %v237
      %v377 = vunpack.c.l.b16 %v238
      %v378 = vunpack.c.l.b16 %v239
      %v379 = vunpack.c.l.b16 %v240
      %v380 = vunpack.c.l.b16 %v241
      %v381 = vunpack.c.l.b16 %v242
      %v382 = vunpack.c.l.b16 %v243
      %v383 = vunpack.c.l.b16 %v244
      %v384 = vunpack.c.l.b16 %v245
      %v385 = vunpack.c.l.b16 %v246
      %v386 = vunpack.c.l.b16 %v247
      %v387 = vunpack.c.l.b16 %v248
      %v388 = vunpack.c.l.b16 %v249
      %v389 = vunpack.c.l.b16 %v250
      %v390 = vunpack.c.l.b16 %v251
      %v391 = vunpack.c.l.b16 %v252
      %v392 = vunpack.c.l.b16 %v253
      %v393 = vunpack.c.l.b16 %v254
      %v394 = vunpack.c.l.b16 %v255
      %v395 = vunpack.c.l.b16 %v256
      %v396 = vunpack.c.l.b16 %v257
      %v397 = vunpack.c.l.b16 %v258
      %v398 = vunpack.c.l.b16 %v259
      %v399 = vunpack.c.l.b16 %v260
      %v400 = vunpack.c.l.b16 %v261
      %v401 = vunpack.c.l.b16 %v262
      %v402 = vunpack.c.l.b16 %v263
      %v403 = vunpack.c.l.b16 %v264
      %v404 = vunpack.c.l.b16 %v265
      %v405 = vunpack.c.l.b16 %v266
      %v406 = vunpack.c.l.b16 %v267
      %v407 = vunpack.c.l.b16 %v268
      %v408 = vunpack.c.l.b16 %v269
      %v409 = vunpack.c.l.b16 %v270
      %v410 = vunpack.c.l.b16 %v271
      %v411 = vunpack.c.l.b16 %v272
      %v412 = vunpack.c.l.b16 %v273
      %v413 = vunpack.c.l.b16 %v274
      %v414 = vunpack.c.l.b16 %v275
      %v415 = vunpack.c.l.b16 %v276
      %v416 = vunpack.c.l.b16 %v277
      %v417 = vunpack.c.l.b16 %v278
      %v418 = vunpack.c.l.b16 %v279
      %v419 = vunpack.c.l.b16 %v280
      %v420 = vunpack.c.l.b16 %v281
      %v421 = vunpack.c.l.b16 %v282
      %v422 = vunpack.c.l.b16 %v283
      %v423 = vunpack.c.l.b16 %v284
      %v424 = vunpack.c.l.b16 %v285
      %v425 = vunpack.c.l.b16 %v286
      %v426 = vunpack.c.l.b16 %v287
      %v427 = vunpack.c.l.b16 %v288
      %v428 = vunpack.c.l.b16 %v289
      %v429 = vpack.c.b16 %v366, %v365
      %v430 = vpack.c.b16 %v368, %v367
      %v431 = vpack.c.b16 %v370, %v369
      %v432 = vpack.c.b16 %v372, %v371
      %v433 = vpack.c.b16 %v374, %v373
      %v434 = vpack.c.b16 %v376, %v375
      %v435 = vpack.c.b16 %v378, %v377
      %v436 = vpack.c.b16 %v380, %v379
      %v437 = vpack.c.b16 %v382, %v381
      %v438 = vpack.c.b16 %v384, %v383
      %v439 = vpack.c.b16 %v386, %v385
      %v440 = vpack.c.b16 %v388, %v387
      %v441 = vpack.c.b16 %v390, %v389
      %v442 = vpack.c.b16 %v392, %v391
      %v443 = vpack.c.b16 %v394, %v393
      %v444 = vpack.c.b16 %v396, %v395
      %v445 = vpack.c.b16 %v398, %v397
      %v446 = vpack.c.b16 %v400, %v399
      %v447 = vpack.c.b16 %v402, %v401
      %v448 = vpack.c.b16 %v404, %v403
      %v449 = vpack.c.b16 %v406, %v405
      %v450 = vpack.c.b16 %v408, %v407
      %v451 = vpack.c.b16 %v410, %v409
      %v452 = vpack.c.b16 %v412, %v411
      %v453 = vpack.c.b16 %v414, %v413
      %v454 = vpack.c.b16 %v416, %v415
      %v455 = vpack.c.b16 %v418, %v417
      %v456 = vpack.c.b16 %v420, %v419
      %v457 = vpack.c.b16 %v422, %v421
      %v458 = vpack.c.b16 %v424, %v423
      %v459 = vpack.c.b16 %v426, %v425
      %v460 = vpack.c.b16 %v428, %v427
      %v465 = vunpack.c.l.b16 %v290
      %v466 = vunpack.c.l.b16 %v291
      %v467 = vunpack.c.l.b16 %v292
      %v468 = vunpack.c.l.b16 %v293
      %v469 = vpack.c.b16 %v466, %v465
      %v470 = vpack.c.b16 %v468, %v467
      %vm472 = vcmask 220160
      %v474 = vsel %vm472, %v429, 0
      %v477 = vsel %vm472, %v430, 0
      %v480 = vsel %vm472, %v431, 0
      %v483 = vsel %vm472, %v432, 0
      %v486 = vsel %vm472, %v433, 0
      %v489 = vsel %vm472, %v434, 0
      %v492 = vsel %vm472, %v435, 0
      %v495 = vsel %vm472, %v436, 0
      %v498 = vsel %vm472, %v437, 0
      %v501 = vsel %vm472, %v438, 0
      %v504 = vsel %vm472, %v439, 0
      %v507 = vsel %vm472, %v440, 0
      %v510 = vsel %vm472, %v441, 0
      %v513 = vsel %vm472, %v442, 0
      %v516 = vsel %vm472, %v443, 0
      %v519 = vsel %vm472, %v444, 0
      %v522 = vsel %vm472, %v445, 0
      %v525 = vsel %vm472, %v446, 0
      %v528 = vsel %vm472, %v447, 0
      %v531 = vsel %vm472, %v448, 0
      %v534 = vsel %vm472, %v449, 0
      %v537 = vsel %vm472, %v450, 0
      %v540 = vsel %vm472, %v451, 0
      %v543 = vsel %vm472, %v452, 0
      %v546 = vsel %vm472, %v453, 0
      %v549 = vsel %vm472, %v454, 0
      %v552 = vsel %vm472, %v455, 0
      %v555 = vsel %vm472, %v456, 0
      %v558 = vsel %vm472, %v457, 0
      %v561 = vsel %vm472, %v458, 0
      %v564 = vsel %vm472, %v459, 0
      %v567 = vsel %vm472, %v460, 0
      %vm569 = vcmask 1044480
      %vm570 = vcmask 1045504
      %v571 = vsel %vm569, 4294967295, 65535
      %v572 = vsel %vm570, %v571, 0
      %v574 = vand.u32 %v470, %v572
      %576 = vmatprep.subr.bf16.mxu0 0
      %577 = vmatpush1.bf16.msra.mxu0 0
      %578 = vmatprep.subr.bf16.mxu0 0
      %579 = vmatpush1.bf16.msra.mxu0 0
      %580 = vmatprep.subr.bf16.mxu0 0
      %581 = vmatpush1.bf16.msra.mxu0 0
      %582 = vmatprep.subr.bf16.mxu0 0
      %583 = vmatpush1.bf16.msra.mxu0 0
      %584 = vmatprep.subr.bf16.mxu0 0
      %585 = vmatpush1.bf16.msra.mxu0 0
      %586 = vmatprep.subr.bf16.mxu0 0
      %587 = vmatpush1.bf16.msra.mxu0 0
      %588 = vmatprep.subr.bf16.mxu0 0
      %589 = vmatpush1.bf16.msra.mxu0 %v574
      %590 = vmatprep.subr.bf16.mxu0 0
      %591 = vmatpush1.bf16.msra.mxu0 %v469
      %592 = vmatprep.subr.bf16.mxu0 0
      %593 = vmatpush2.bf16.msra.mxu0 0
      %594 = vmatprep.subr.bf16.mxu0 0
      %595 = vmatpush2.bf16.msra.mxu0 0
      %596 = vmatprep.subr.bf16.mxu0 0
      %597 = vmatpush2.bf16.msra.mxu0 0
      %598 = vmatprep.subr.bf16.mxu0 0
      %599 = vmatpush2.bf16.msra.mxu0 0
      %600 = vmatprep.subr.bf16.mxu0 0
      %601 = vmatpush2.bf16.msra.mxu0 0
      %602 = vmatprep.subr.bf16.mxu0 0
      %603 = vmatpush2.bf16.msra.mxu0 0
      %604 = vmatprep.subr.bf16.mxu0 0
      %605 = vmatpush2.bf16.msra.mxu0 0
      %606 = vmatprep.subr.bf16.mxu0 0
      %607 = vmatpush2.bf16.msra.mxu0 0
      %608 = vmatprep.mubr.bf16.mxu0 0
      %609 = vmatmul.mubr.bf16.gmra.mxu0 %v474
      %v610 = vpop.f32.mrf.mxu0
      %v611 = vadd.f32 %v299, %v610
      %v612 = vpop.f32.mrf.mxu0
      %v613 = vpop.f32.mrf.mxu0
      %v614 = vadd.f32 %v299, %v613
      %v615 = vpop.f32.mrf.mxu0
      %616 = vmatprep.mubr.bf16.mxu0 0
      %617 = vmatmul.mubr.bf16.gmra.mxu0 %v477
      %v618 = vpop.f32.mrf.mxu0
      %v619 = vadd.f32 %v299, %v618
      %v620 = vpop.f32.mrf.mxu0
      %v621 = vpop.f32.mrf.mxu0
      %v622 = vadd.f32 %v299, %v621
      %v623 = vpop.f32.mrf.mxu0
      %624 = vmatprep.mubr.bf16.mxu0 0
      %625 = vmatmul.mubr.bf16.gmra.mxu0 %v480
      %v626 = vpop.f32.mrf.mxu0
      %v627 = vadd.f32 %v299, %v626
      %v628 = vpop.f32.mrf.mxu0
      %v629 = vpop.f32.mrf.mxu0
      %v630 = vadd.f32 %v299, %v629
      %v631 = vpop.f32.mrf.mxu0
      %632 = vmatprep.mubr.bf16.mxu0 0
      %633 = vmatmul.mubr.bf16.gmra.mxu0 %v483
      %v634 = vpop.f32.mrf.mxu0
      %v635 = vadd.f32 %v299, %v634
      %v636 = vpop.f32.mrf.mxu0
      %v637 = vpop.f32.mrf.mxu0
      %v638 = vadd.f32 %v299, %v637
      %v639 = vpop.f32.mrf.mxu0
      %640 = vmatprep.mubr.bf16.mxu0 0
      %641 = vmatmul.mubr.bf16.gmra.mxu0 %v486
      %v642 = vpop.f32.mrf.mxu0
      %v643 = vadd.f32 %v299, %v642
      %v644 = vpop.f32.mrf.mxu0
      %v645 = vpop.f32.mrf.mxu0
      %v646 = vadd.f32 %v299, %v645
      %v647 = vpop.f32.mrf.mxu0
      %648 = vmatprep.mubr.bf16.mxu0 0
      %649 = vmatmul.mubr.bf16.gmra.mxu0 %v489
      %v650 = vpop.f32.mrf.mxu0
      %v651 = vadd.f32 %v299, %v650
      %v652 = vpop.f32.mrf.mxu0
      %v653 = vpop.f32.mrf.mxu0
      %v654 = vadd.f32 %v299, %v653
      %v655 = vpop.f32.mrf.mxu0
      %656 = vmatprep.mubr.bf16.mxu0 0
      %657 = vmatmul.mubr.bf16.gmra.mxu0 %v492
      %v658 = vpop.f32.mrf.mxu0
      %v659 = vadd.f32 %v299, %v658
      %v660 = vpop.f32.mrf.mxu0
      %v661 = vpop.f32.mrf.mxu0
      %v662 = vadd.f32 %v299, %v661
      %v663 = vpop.f32.mrf.mxu0
      %664 = vmatprep.mubr.bf16.mxu0 0
      %665 = vmatmul.mubr.bf16.gmra.mxu0 %v495
      %v666 = vpop.f32.mrf.mxu0
      %v667 = vadd.f32 %v299, %v666
      %v668 = vpop.f32.mrf.mxu0
      %v669 = vpop.f32.mrf.mxu0
      %v670 = vadd.f32 %v299, %v669
      %v671 = vpop.f32.mrf.mxu0
      %672 = vmatprep.mubr.bf16.mxu0 0
      %673 = vmatmul.mubr.bf16.gmra.mxu0 %v498
      %v674 = vpop.f32.mrf.mxu0
      %v675 = vadd.f32 %v299, %v674
      %v676 = vpop.f32.mrf.mxu0
      %v677 = vpop.f32.mrf.mxu0
      %v678 = vadd.f32 %v299, %v677
      %v679 = vpop.f32.mrf.mxu0
      %680 = vmatprep.mubr.bf16.mxu0 0
      %681 = vmatmul.mubr.bf16.gmra.mxu0 %v501
      %v682 = vpop.f32.mrf.mxu0
      %v683 = vadd.f32 %v299, %v682
      %v684 = vpop.f32.mrf.mxu0
      %v685 = vpop.f32.mrf.mxu0
      %v686 = vadd.f32 %v299, %v685
      %v687 = vpop.f32.mrf.mxu0
      %688 = vmatprep.mubr.bf16.mxu0 0
      %689 = vmatmul.mubr.bf16.gmra.mxu0 %v504
      %v690 = vpop.f32.mrf.mxu0
      %v691 = vadd.f32 %v299, %v690
      %v692 = vpop.f32.mrf.mxu0
      %v693 = vpop.f32.mrf.mxu0
      %v694 = vadd.f32 %v299, %v693
      %v695 = vpop.f32.mrf.mxu0
      %696 = vmatprep.mubr.bf16.mxu0 0
      %697 = vmatmul.mubr.bf16.gmra.mxu0 %v507
      %v698 = vpop.f32.mrf.mxu0
      %v699 = vadd.f32 %v299, %v698
      %v700 = vpop.f32.mrf.mxu0
      %v701 = vpop.f32.mrf.mxu0
      %v702 = vadd.f32 %v299, %v701
      %v703 = vpop.f32.mrf.mxu0
      %704 = vmatprep.mubr.bf16.mxu0 0
      %705 = vmatmul.mubr.bf16.gmra.mxu0 %v510
      %v706 = vpop.f32.mrf.mxu0
      %v707 = vadd.f32 %v299, %v706
      %v708 = vpop.f32.mrf.mxu0
      %v709 = vpop.f32.mrf.mxu0
      %v710 = vadd.f32 %v299, %v709
      %v711 = vpop.f32.mrf.mxu0
      %712 = vmatprep.mubr.bf16.mxu0 0
      %713 = vmatmul.mubr.bf16.gmra.mxu0 %v513
      %v714 = vpop.f32.mrf.mxu0
      %v715 = vadd.f32 %v299, %v714
      %v716 = vpop.f32.mrf.mxu0
      %v717 = vpop.f32.mrf.mxu0
      %v718 = vadd.f32 %v299, %v717
      %v719 = vpop.f32.mrf.mxu0
      %720 = vmatprep.mubr.bf16.mxu0 0
      %721 = vmatmul.mubr.bf16.gmra.mxu0 %v516
      %v722 = vpop.f32.mrf.mxu0
      %v723 = vadd.f32 %v299, %v722
      %v724 = vpop.f32.mrf.mxu0
      %v725 = vpop.f32.mrf.mxu0
      %v726 = vadd.f32 %v299, %v725
      %v727 = vpop.f32.mrf.mxu0
      %728 = vmatprep.mubr.bf16.mxu0 0
      %729 = vmatmul.mubr.bf16.gmra.mxu0 %v519
      %v730 = vpop.f32.mrf.mxu0
      %v731 = vadd.f32 %v299, %v730
      %v732 = vpop.f32.mrf.mxu0
      %v733 = vpop.f32.mrf.mxu0
      %v734 = vadd.f32 %v299, %v733
      %v735 = vpop.f32.mrf.mxu0
      %736 = vmatprep.mubr.bf16.mxu0 0
      %737 = vmatmul.mubr.bf16.gmra.mxu0 %v522
      %v738 = vpop.f32.mrf.mxu0
      %v739 = vadd.f32 %v299, %v738
      %v740 = vpop.f32.mrf.mxu0
      %v741 = vpop.f32.mrf.mxu0
      %v742 = vadd.f32 %v299, %v741
      %v743 = vpop.f32.mrf.mxu0
      %744 = vmatprep.mubr.bf16.mxu0 0
      %745 = vmatmul.mubr.bf16.gmra.mxu0 %v525
      %v746 = vpop.f32.mrf.mxu0
      %v747 = vadd.f32 %v299, %v746
      %v748 = vpop.f32.mrf.mxu0
      %v749 = vpop.f32.mrf.mxu0
      %v750 = vadd.f32 %v299, %v749
      %v751 = vpop.f32.mrf.mxu0
      %752 = vmatprep.mubr.bf16.mxu0 0
      %753 = vmatmul.mubr.bf16.gmra.mxu0 %v528
      %v754 = vpop.f32.mrf.mxu0
      %v755 = vadd.f32 %v299, %v754
      %v756 = vpop.f32.mrf.mxu0
      %v757 = vpop.f32.mrf.mxu0
      %v758 = vadd.f32 %v299, %v757
      %v759 = vpop.f32.mrf.mxu0
      %760 = vmatprep.mubr.bf16.mxu0 0
      %761 = vmatmul.mubr.bf16.gmra.mxu0 %v531
      %v762 = vpop.f32.mrf.mxu0
      %v763 = vadd.f32 %v299, %v762
      %v764 = vpop.f32.mrf.mxu0
      %v765 = vpop.f32.mrf.mxu0
      %v766 = vadd.f32 %v299, %v765
      %v767 = vpop.f32.mrf.mxu0
      %768 = vmatprep.mubr.bf16.mxu0 0
      %769 = vmatmul.mubr.bf16.gmra.mxu0 %v534
      %v770 = vpop.f32.mrf.mxu0
      %v771 = vadd.f32 %v299, %v770
      %v772 = vpop.f32.mrf.mxu0
      %v773 = vpop.f32.mrf.mxu0
      %v774 = vadd.f32 %v299, %v773
      %v775 = vpop.f32.mrf.mxu0
      %776 = vmatprep.mubr.bf16.mxu0 0
      %777 = vmatmul.mubr.bf16.gmra.mxu0 %v537
      %v778 = vpop.f32.mrf.mxu0
      %v779 = vadd.f32 %v299, %v778
      %v780 = vpop.f32.mrf.mxu0
      %v781 = vpop.f32.mrf.mxu0
      %v782 = vadd.f32 %v299, %v781
      %v783 = vpop.f32.mrf.mxu0
      %784 = vmatprep.mubr.bf16.mxu0 0
      %785 = vmatmul.mubr.bf16.gmra.mxu0 %v540
      %v786 = vpop.f32.mrf.mxu0
      %v787 = vadd.f32 %v299, %v786
      %v788 = vpop.f32.mrf.mxu0
      %v789 = vpop.f32.mrf.mxu0
      %v790 = vadd.f32 %v299, %v789
      %v791 = vpop.f32.mrf.mxu0
      %792 = vmatprep.mubr.bf16.mxu0 0
      %793 = vmatmul.mubr.bf16.gmra.mxu0 %v543
      %v794 = vpop.f32.mrf.mxu0
      %v795 = vadd.f32 %v299, %v794
      %v796 = vpop.f32.mrf.mxu0
      %v797 = vpop.f32.mrf.mxu0
      %v798 = vadd.f32 %v299, %v797
      %v799 = vpop.f32.mrf.mxu0
      %800 = vmatprep.mubr.bf16.mxu0 0
      %801 = vmatmul.mubr.bf16.gmra.mxu0 %v546
      %v802 = vpop.f32.mrf.mxu0
      %v803 = vadd.f32 %v299, %v802
      %v804 = vpop.f32.mrf.mxu0
      %v805 = vpop.f32.mrf.mxu0
      %v806 = vadd.f32 %v299, %v805
      %v807 = vpop.f32.mrf.mxu0
      %808 = vmatprep.mubr.bf16.mxu0 0
      %809 = vmatmul.mubr.bf16.gmra.mxu0 %v549
      %v810 = vpop.f32.mrf.mxu0
      %v811 = vadd.f32 %v299, %v810
      %v812 = vpop.f32.mrf.mxu0
      %v813 = vpop.f32.mrf.mxu0
      %v814 = vadd.f32 %v299, %v813
      %v815 = vpop.f32.mrf.mxu0
      %816 = vmatprep.mubr.bf16.mxu0 0
      %817 = vmatmul.mubr.bf16.gmra.mxu0 %v552
      %v818 = vpop.f32.mrf.mxu0
      %v819 = vadd.f32 %v299, %v818
      %v820 = vpop.f32.mrf.mxu0
      %v821 = vpop.f32.mrf.mxu0
      %v822 = vadd.f32 %v299, %v821
      %v823 = vpop.f32.mrf.mxu0
      %824 = vmatprep.mubr.bf16.mxu0 0
      %825 = vmatmul.mubr.bf16.gmra.mxu0 %v555
      %v826 = vpop.f32.mrf.mxu0
      %v827 = vadd.f32 %v299, %v826
      %v828 = vpop.f32.mrf.mxu0
      %v829 = vpop.f32.mrf.mxu0
      %v830 = vadd.f32 %v299, %v829
      %v831 = vpop.f32.mrf.mxu0
      %832 = vmatprep.mubr.bf16.mxu0 0
      %833 = vmatmul.mubr.bf16.gmra.mxu0 %v558
      %v834 = vpop.f32.mrf.mxu0
      %v835 = vadd.f32 %v299, %v834
      %v836 = vpop.f32.mrf.mxu0
      %v837 = vpop.f32.mrf.mxu0
      %v838 = vadd.f32 %v299, %v837
      %v839 = vpop.f32.mrf.mxu0
      %840 = vmatprep.mubr.bf16.mxu0 0
      %841 = vmatmul.mubr.bf16.gmra.mxu0 %v561
      %v842 = vpop.f32.mrf.mxu0
      %v843 = vadd.f32 %v299, %v842
      %v844 = vpop.f32.mrf.mxu0
      %v845 = vpop.f32.mrf.mxu0
      %v846 = vadd.f32 %v299, %v845
      %v847 = vpop.f32.mrf.mxu0
      %848 = vmatprep.mubr.bf16.mxu0 0
      %849 = vmatmul.mubr.bf16.gmra.mxu0 %v564
      %v850 = vpop.f32.mrf.mxu0
      %v851 = vadd.f32 %v299, %v850
      %v852 = vpop.f32.mrf.mxu0
      %v853 = vpop.f32.mrf.mxu0
      %v854 = vadd.f32 %v299, %v853
      %v855 = vpop.f32.mrf.mxu0
      %856 = vmatprep.mubr.bf16.mxu0 0
      %857 = vmatmul.mubr.bf16.gmra.mxu0 %v567
      %v858 = vpop.f32.mrf.mxu0
      %v859 = vadd.f32 %v299, %v858
      %v860 = vpop.f32.mrf.mxu0
      %v861 = vpop.f32.mrf.mxu0
      %v862 = vadd.f32 %v299, %v861
      %v863 = vpop.f32.mrf.mxu0
      %864 = vdwg.mxu0
      %v865 = vadd.f32 %v611, 3.0
      %v866 = vadd.f32 %v614, 3.0
      %v867 = vadd.f32 %v619, 3.0
      %v868 = vadd.f32 %v622, 3.0
      %v869 = vadd.f32 %v627, 3.0
      %v870 = vadd.f32 %v630, 3.0
      %v871 = vadd.f32 %v635, 3.0
      %v872 = vadd.f32 %v638, 3.0
      %v873 = vadd.f32 %v643, 3.0
      %v874 = vadd.f32 %v646, 3.0
      %v875 = vadd.f32 %v651, 3.0
      %v876 = vadd.f32 %v654, 3.0
      %v877 = vadd.f32 %v659, 3.0
      %v878 = vadd.f32 %v662, 3.0
      %v879 = vadd.f32 %v667, 3.0
      %v880 = vadd.f32 %v670, 3.0
      %v881 = vadd.f32 %v675, 3.0
      %v882 = vadd.f32 %v678, 3.0
      %v883 = vadd.f32 %v683, 3.0
      %v884 = vadd.f32 %v686, 3.0
      %v885 = vadd.f32 %v691, 3.0
      %v886 = vadd.f32 %v694, 3.0
      %v887 = vadd.f32 %v699, 3.0
      %v888 = vadd.f32 %v702, 3.0
      %v889 = vadd.f32 %v707, 3.0
      %v890 = vadd.f32 %v710, 3.0
      %v891 = vadd.f32 %v715, 3.0
      %v892 = vadd.f32 %v718, 3.0
      %v893 = vadd.f32 %v723, 3.0
      %v894 = vadd.f32 %v726, 3.0
      %v895 = vadd.f32 %v731, 3.0
      %v896 = vadd.f32 %v734, 3.0
      %v897 = vadd.f32 %v739, 3.0
      %v898 = vadd.f32 %v742, 3.0
      %v899 = vadd.f32 %v747, 3.0
      %v900 = vadd.f32 %v750, 3.0
      %v901 = vadd.f32 %v755, 3.0
      %v902 = vadd.f32 %v758, 3.0
      %v903 = vadd.f32 %v763, 3.0
      %v904 = vadd.f32 %v766, 3.0
      %v905 = vadd.f32 %v771, 3.0
      %v906 = vadd.f32 %v774, 3.0
      %v907 = vadd.f32 %v779, 3.0
      %v908 = vadd.f32 %v782, 3.0
      %v909 = vadd.f32 %v787, 3.0
      %v910 = vadd.f32 %v790, 3.0
      %v911 = vadd.f32 %v795, 3.0
      %v912 = vadd.f32 %v798, 3.0
      %v913 = vadd.f32 %v803, 3.0
      %v914 = vadd.f32 %v806, 3.0
      %v915 = vadd.f32 %v811, 3.0
      %v916 = vadd.f32 %v814, 3.0
      %v917 = vadd.f32 %v819, 3.0
      %v918 = vadd.f32 %v822, 3.0
      %v919 = vadd.f32 %v827, 3.0
      %v920 = vadd.f32 %v830, 3.0
      %v921 = vadd.f32 %v835, 3.0
      %v922 = vadd.f32 %v838, 3.0
      %v923 = vadd.f32 %v843, 3.0
      %v924 = vadd.f32 %v846, 3.0
      %v925 = vadd.f32 %v851, 3.0
      %v926 = vadd.f32 %v854, 3.0
      %v927 = vadd.f32 %v859, 3.0
      %v928 = vadd.f32 %v862, 3.0
      %v929 = vmax.f32 %v865, 0.0
      %v930 = vmax.f32 %v866, 0.0
      %v931 = vmax.f32 %v867, 0.0
      %v932 = vmax.f32 %v868, 0.0
      %v933 = vmax.f32 %v869, 0.0
      %v934 = vmax.f32 %v870, 0.0
      %v935 = vmax.f32 %v871, 0.0
      %v936 = vmax.f32 %v872, 0.0
      %v937 = vmax.f32 %v873, 0.0
      %v938 = vmax.f32 %v874, 0.0
      %v939 = vmax.f32 %v875, 0.0
      %v940 = vmax.f32 %v876, 0.0
      %v941 = vmax.f32 %v877, 0.0
      %v942 = vmax.f32 %v878, 0.0
      %v943 = vmax.f32 %v879, 0.0
      %v944 = vmax.f32 %v880, 0.0
      %v945 = vmax.f32 %v881, 0.0
      %v946 = vmax.f32 %v882, 0.0
      %v947 = vmax.f32 %v883, 0.0
      %v948 = vmax.f32 %v884, 0.0
      %v949 = vmax.f32 %v885, 0.0
      %v950 = vmax.f32 %v886, 0.0
      %v951 = vmax.f32 %v887, 0.0
      %v952 = vmax.f32 %v888, 0.0
      %v953 = vmax.f32 %v889, 0.0
      %v954 = vmax.f32 %v890, 0.0
      %v955 = vmax.f32 %v891, 0.0
      %v956 = vmax.f32 %v892, 0.0
      %v957 = vmax.f32 %v893, 0.0
      %v958 = vmax.f32 %v894, 0.0
      %v959 = vmax.f32 %v895, 0.0
      %v960 = vmax.f32 %v896, 0.0
      %v961 = vmax.f32 %v897, 0.0
      %v962 = vmax.f32 %v898, 0.0
      %v963 = vmax.f32 %v899, 0.0
      %v964 = vmax.f32 %v900, 0.0
      %v965 = vmax.f32 %v901, 0.0
      %v966 = vmax.f32 %v902, 0.0
      %v967 = vmax.f32 %v903, 0.0
      %v968 = vmax.f32 %v904, 0.0
      %v969 = vmax.f32 %v905, 0.0
      %v970 = vmax.f32 %v906, 0.0
      %v971 = vmax.f32 %v907, 0.0
      %v972 = vmax.f32 %v908, 0.0
      %v973 = vmax.f32 %v909, 0.0
      %v974 = vmax.f32 %v910, 0.0
      %v975 = vmax.f32 %v911, 0.0
      %v976 = vmax.f32 %v912, 0.0
      %v977 = vmax.f32 %v913, 0.0
      %v978 = vmax.f32 %v914, 0.0
      %v979 = vmax.f32 %v915, 0.0
      %v980 = vmax.f32 %v916, 0.0
      %v981 = vmax.f32 %v917, 0.0
      %v982 = vmax.f32 %v918, 0.0
      %v983 = vmax.f32 %v919, 0.0
      %v984 = vmax.f32 %v920, 0.0
      %v985 = vmax.f32 %v921, 0.0
      %v986 = vmax.f32 %v922, 0.0
      %v987 = vmax.f32 %v923, 0.0
      %v988 = vmax.f32 %v924, 0.0
      %v989 = vmax.f32 %v925, 0.0
      %v990 = vmax.f32 %v926, 0.0
      %v991 = vmax.f32 %v927, 0.0
      %v992 = vmax.f32 %v928, 0.0
      %v993 = vmin.f32 %v929, 6.0
      %v994 = vmin.f32 %v930, 6.0
      %v995 = vmin.f32 %v931, 6.0
      %v996 = vmin.f32 %v932, 6.0
      %v997 = vmin.f32 %v933, 6.0
      %v998 = vmin.f32 %v934, 6.0
      %v999 = vmin.f32 %v935, 6.0
      %v1000 = vmin.f32 %v936, 6.0
      %v1001 = vmin.f32 %v937, 6.0
      %v1002 = vmin.f32 %v938, 6.0
      %v1003 = vmin.f32 %v939, 6.0
      %v1004 = vmin.f32 %v940, 6.0
      %v1005 = vmin.f32 %v941, 6.0
      %v1006 = vmin.f32 %v942, 6.0
      %v1007 = vmin.f32 %v943, 6.0
      %v1008 = vmin.f32 %v944, 6.0
      %v1009 = vmin.f32 %v945, 6.0
      %v1010 = vmin.f32 %v946, 6.0
      %v1011 = vmin.f32 %v947, 6.0
      %v1012 = vmin.f32 %v948, 6.0
      %v1013 = vmin.f32 %v949, 6.0
      %v1014 = vmin.f32 %v950, 6.0
      %v1015 = vmin.f32 %v951, 6.0
      %v1016 = vmin.f32 %v952, 6.0
      %v1017 = vmin.f32 %v953, 6.0
      %v1018 = vmin.f32 %v954, 6.0
      %v1019 = vmin.f32 %v955, 6.0
      %v1020 = vmin.f32 %v956, 6.0
      %v1021 = vmin.f32 %v957, 6.0
      %v1022 = vmin.f32 %v958, 6.0
      %v1023 = vmin.f32 %v959, 6.0
      %v1024 = vmin.f32 %v960, 6.0
      %v1025 = vmin.f32 %v961, 6.0
      %v1026 = vmin.f32 %v962, 6.0
      %v1027 = vmin.f32 %v963, 6.0
      %v1028 = vmin.f32 %v964, 6.0
      %v1029 = vmin.f32 %v965, 6.0
      %v1030 = vmin.f32 %v966, 6.0
      %v1031 = vmin.f32 %v967, 6.0
      %v1032 = vmin.f32 %v968, 6.0
      %v1033 = vmin.f32 %v969, 6.0
      %v1034 = vmin.f32 %v970, 6.0
      %v1035 = vmin.f32 %v971, 6.0
      %v1036 = vmin.f32 %v972, 6.0
      %v1037 = vmin.f32 %v973, 6.0
      %v1038 = vmin.f32 %v974, 6.0
      %v1039 = vmin.f32 %v975, 6.0
      %v1040 = vmin.f32 %v976, 6.0
      %v1041 = vmin.f32 %v977, 6.0
      %v1042 = vmin.f32 %v978, 6.0
      %v1043 = vmin.f32 %v979, 6.0
      %v1044 = vmin.f32 %v980, 6.0
      %v1045 = vmin.f32 %v981, 6.0
      %v1046 = vmin.f32 %v982, 6.0
      %v1047 = vmin.f32 %v983, 6.0
      %v1048 = vmin.f32 %v984, 6.0
      %v1049 = vmin.f32 %v985, 6.0
      %v1050 = vmin.f32 %v986, 6.0
      %v1051 = vmin.f32 %v987, 6.0
      %v1052 = vmin.f32 %v988, 6.0
      %v1053 = vmin.f32 %v989, 6.0
      %v1054 = vmin.f32 %v990, 6.0
      %v1055 = vmin.f32 %v991, 6.0
      %v1056 = vmin.f32 %v992, 6.0
      %v1057 = vmul.f32 %v611, %v993
      %v1058 = vmul.f32 %v614, %v994
      %v1059 = vmul.f32 %v619, %v995
      %v1060 = vmul.f32 %v622, %v996
      %v1061 = vmul.f32 %v627, %v997
      %v1062 = vmul.f32 %v630, %v998
      %v1063 = vmul.f32 %v635, %v999
      %v1064 = vmul.f32 %v638, %v1000
      %v1065 = vmul.f32 %v643, %v1001
      %v1066 = vmul.f32 %v646, %v1002
      %v1067 = vmul.f32 %v651, %v1003
      %v1068 = vmul.f32 %v654, %v1004
      %v1069 = vmul.f32 %v659, %v1005
      %v1070 = vmul.f32 %v662, %v1006
      %v1071 = vmul.f32 %v667, %v1007
      %v1072 = vmul.f32 %v670, %v1008
      %v1073 = vmul.f32 %v675, %v1009
      %v1074 = vmul.f32 %v678, %v1010
      %v1075 = vmul.f32 %v683, %v1011
      %v1076 = vmul.f32 %v686, %v1012
      %v1077 = vmul.f32 %v691, %v1013
      %v1078 = vmul.f32 %v694, %v1014
      %v1079 = vmul.f32 %v699, %v1015
      %v1080 = vmul.f32 %v702, %v1016
      %v1081 = vmul.f32 %v707, %v1017
      %v1082 = vmul.f32 %v710, %v1018
      %v1083 = vmul.f32 %v715, %v1019
      %v1084 = vmul.f32 %v718, %v1020
      %v1085 = vmul.f32 %v723, %v1021
      %v1086 = vmul.f32 %v726, %v1022
      %v1087 = vmul.f32 %v731, %v1023
      %v1088 = vmul.f32 %v734, %v1024
      %v1089 = vmul.f32 %v739, %v1025
      %v1090 = vmul.f32 %v742, %v1026
      %v1091 = vmul.f32 %v747, %v1027
      %v1092 = vmul.f32 %v750, %v1028
      %v1093 = vmul.f32 %v755, %v1029
      %v1094 = vmul.f32 %v758, %v1030
      %v1095 = vmul.f32 %v763, %v1031
      %v1096 = vmul.f32 %v766, %v1032
      %v1097 = vmul.f32 %v771, %v1033
      %v1098 = vmul.f32 %v774, %v1034
      %v1099 = vmul.f32 %v779, %v1035
      %v1100 = vmul.f32 %v782, %v1036
      %v1101 = vmul.f32 %v787, %v1037
      %v1102 = vmul.f32 %v790, %v1038
      %v1103 = vmul.f32 %v795, %v1039
      %v1104 = vmul.f32 %v798, %v1040
      %v1105 = vmul.f32 %v803, %v1041
      %v1106 = vmul.f32 %v806, %v1042
      %v1107 = vmul.f32 %v811, %v1043
      %v1108 = vmul.f32 %v814, %v1044
      %v1109 = vmul.f32 %v819, %v1045
      %v1110 = vmul.f32 %v822, %v1046
      %v1111 = vmul.f32 %v827, %v1047
      %v1112 = vmul.f32 %v830, %v1048
      %v1113 = vmul.f32 %v835, %v1049
      %v1114 = vmul.f32 %v838, %v1050
      %v1115 = vmul.f32 %v843, %v1051
      %v1116 = vmul.f32 %v846, %v1052
      %v1117 = vmul.f32 %v851, %v1053
      %v1118 = vmul.f32 %v854, %v1054
      %v1119 = vmul.f32 %v859, %v1055
      %v1120 = vmul.f32 %v862, %v1056
      %v1121 = vmul.f32 %v1057, 0.16666667
      %v1122 = vmul.f32 %v1058, 0.16666667
      %v1123 = vmul.f32 %v1059, 0.16666667
      %v1124 = vmul.f32 %v1060, 0.16666667
      %v1125 = vmul.f32 %v1061, 0.16666667
      %v1126 = vmul.f32 %v1062, 0.16666667
      %v1127 = vmul.f32 %v1063, 0.16666667
      %v1128 = vmul.f32 %v1064, 0.16666667
      %v1129 = vmul.f32 %v1065, 0.16666667
      %v1130 = vmul.f32 %v1066, 0.16666667
      %v1131 = vmul.f32 %v1067, 0.16666667
      %v1132 = vmul.f32 %v1068, 0.16666667
      %v1133 = vmul.f32 %v1069, 0.16666667
      %v1134 = vmul.f32 %v1070, 0.16666667
      %v1135 = vmul.f32 %v1071, 0.16666667
      %v1136 = vmul.f32 %v1072, 0.16666667
      %v1137 = vmul.f32 %v1073, 0.16666667
      %v1138 = vmul.f32 %v1074, 0.16666667
      %v1139 = vmul.f32 %v1075, 0.16666667
      %v1140 = vmul.f32 %v1076, 0.16666667
      %v1141 = vmul.f32 %v1077, 0.16666667
      %v1142 = vmul.f32 %v1078, 0.16666667
      %v1143 = vmul.f32 %v1079, 0.16666667
      %v1144 = vmul.f32 %v1080, 0.16666667
      %v1145 = vmul.f32 %v1081, 0.16666667
      %v1146 = vmul.f32 %v1082, 0.16666667
      %v1147 = vmul.f32 %v1083, 0.16666667
      %v1148 = vmul.f32 %v1084, 0.16666667
      %v1149 = vmul.f32 %v1085, 0.16666667
      %v1150 = vmul.f32 %v1086, 0.16666667
      %v1151 = vmul.f32 %v1087, 0.16666667
      %v1152 = vmul.f32 %v1088, 0.16666667
      %v1153 = vmul.f32 %v1089, 0.16666667
      %v1154 = vmul.f32 %v1090, 0.16666667
      %v1155 = vmul.f32 %v1091, 0.16666667
      %v1156 = vmul.f32 %v1092, 0.16666667
      %v1157 = vmul.f32 %v1093, 0.16666667
      %v1158 = vmul.f32 %v1094, 0.16666667
      %v1159 = vmul.f32 %v1095, 0.16666667
      %v1160 = vmul.f32 %v1096, 0.16666667
      %v1161 = vmul.f32 %v1097, 0.16666667
      %v1162 = vmul.f32 %v1098, 0.16666667
      %v1163 = vmul.f32 %v1099, 0.16666667
      %v1164 = vmul.f32 %v1100, 0.16666667
      %v1165 = vmul.f32 %v1101, 0.16666667
      %v1166 = vmul.f32 %v1102, 0.16666667
      %v1167 = vmul.f32 %v1103, 0.16666667
      %v1168 = vmul.f32 %v1104, 0.16666667
      %v1169 = vmul.f32 %v1105, 0.16666667
      %v1170 = vmul.f32 %v1106, 0.16666667
      %v1171 = vmul.f32 %v1107, 0.16666667
      %v1172 = vmul.f32 %v1108, 0.16666667
      %v1173 = vmul.f32 %v1109, 0.16666667
      %v1174 = vmul.f32 %v1110, 0.16666667
      %v1175 = vmul.f32 %v1111, 0.16666667
      %v1176 = vmul.f32 %v1112, 0.16666667
      %v1177 = vmul.f32 %v1113, 0.16666667
      %v1178 = vmul.f32 %v1114, 0.16666667
      %v1179 = vmul.f32 %v1115, 0.16666667
      %v1180 = vmul.f32 %v1116, 0.16666667
      %v1181 = vmul.f32 %v1117, 0.16666667
      %v1182 = vmul.f32 %v1118, 0.16666667
      %v1183 = vmul.f32 %v1119, 0.16666667
      %v1184 = vmul.f32 %v1120, 0.16666667
      %v1185 = vpack.c.bf16 %v1122, %v1121
      %v1186 = vpack.c.bf16 %v1124, %v1123
      %v1187 = vpack.c.bf16 %v1126, %v1125
      %v1188 = vpack.c.bf16 %v1128, %v1127
      %v1189 = vpack.c.bf16 %v1130, %v1129
      %v1190 = vpack.c.bf16 %v1132, %v1131
      %v1191 = vpack.c.bf16 %v1134, %v1133
      %v1192 = vpack.c.bf16 %v1136, %v1135
      %v1193 = vpack.c.bf16 %v1138, %v1137
      %v1194 = vpack.c.bf16 %v1140, %v1139
      %v1195 = vpack.c.bf16 %v1142, %v1141
      %v1196 = vpack.c.bf16 %v1144, %v1143
      %v1197 = vpack.c.bf16 %v1146, %v1145
      %v1198 = vpack.c.bf16 %v1148, %v1147
      %v1199 = vpack.c.bf16 %v1150, %v1149
      %v1200 = vpack.c.bf16 %v1152, %v1151
      %v1201 = vpack.c.bf16 %v1154, %v1153
      %v1202 = vpack.c.bf16 %v1156, %v1155
      %v1203 = vpack.c.bf16 %v1158, %v1157
      %v1204 = vpack.c.bf16 %v1160, %v1159
      %v1205 = vpack.c.bf16 %v1162, %v1161
      %v1206 = vpack.c.bf16 %v1164, %v1163
      %v1207 = vpack.c.bf16 %v1166, %v1165
      %v1208 = vpack.c.bf16 %v1168, %v1167
      %v1209 = vpack.c.bf16 %v1170, %v1169
      %v1210 = vpack.c.bf16 %v1172, %v1171
      %v1211 = vpack.c.bf16 %v1174, %v1173
      %v1212 = vpack.c.bf16 %v1176, %v1175
      %v1213 = vpack.c.bf16 %v1178, %v1177
      %v1214 = vpack.c.bf16 %v1180, %v1179
      %v1215 = vpack.c.bf16 %v1182, %v1181
      %v1216 = vpack.c.bf16 %v1184, %v1183
      %v1249 = vunpack.c.l.b16 %v1185
      %v1250 = vunpack.c.h.b16 %v1185
      %v1251 = vunpack.c.l.b16 %v1186
      %v1252 = vunpack.c.h.b16 %v1186
      %v1253 = vunpack.c.l.b16 %v1187
      %v1254 = vunpack.c.h.b16 %v1187
      %v1255 = vunpack.c.l.b16 %v1188
      %v1256 = vunpack.c.h.b16 %v1188
      %v1257 = vunpack.c.l.b16 %v1189
      %v1258 = vunpack.c.h.b16 %v1189
      %v1259 = vunpack.c.l.b16 %v1190
      %v1260 = vunpack.c.h.b16 %v1190
      %v1261 = vunpack.c.l.b16 %v1191
      %v1262 = vunpack.c.h.b16 %v1191
      %v1263 = vunpack.c.l.b16 %v1192
      %v1264 = vunpack.c.h.b16 %v1192
      %v1265 = vunpack.c.l.b16 %v1193
      %v1266 = vunpack.c.h.b16 %v1193
      %v1267 = vunpack.c.l.b16 %v1194
      %v1268 = vunpack.c.h.b16 %v1194
      %v1269 = vunpack.c.l.b16 %v1195
      %v1270 = vunpack.c.h.b16 %v1195
      %v1271 = vunpack.c.l.b16 %v1196
      %v1272 = vunpack.c.h.b16 %v1196
      %v1273 = vunpack.c.l.b16 %v1197
      %v1274 = vunpack.c.h.b16 %v1197
      %v1275 = vunpack.c.l.b16 %v1198
      %v1276 = vunpack.c.h.b16 %v1198
      %v1277 = vunpack.c.l.b16 %v1199
      %v1278 = vunpack.c.h.b16 %v1199
      %v1279 = vunpack.c.l.b16 %v1200
      %v1280 = vunpack.c.h.b16 %v1200
      %v1281 = vunpack.c.l.b16 %v1201
      %v1282 = vunpack.c.h.b16 %v1201
      %v1283 = vunpack.c.l.b16 %v1202
      %v1284 = vunpack.c.h.b16 %v1202
      %v1285 = vunpack.c.l.b16 %v1203
      %v1286 = vunpack.c.h.b16 %v1203
      %v1287 = vunpack.c.l.b16 %v1204
      %v1288 = vunpack.c.h.b16 %v1204
      %v1289 = vunpack.c.l.b16 %v1205
      %v1290 = vunpack.c.h.b16 %v1205
      %v1291 = vunpack.c.l.b16 %v1206
      %v1292 = vunpack.c.h.b16 %v1206
      %v1293 = vunpack.c.l.b16 %v1207
      %v1294 = vunpack.c.h.b16 %v1207
      %v1295 = vunpack.c.l.b16 %v1208
      %v1296 = vunpack.c.h.b16 %v1208
      %v1297 = vunpack.c.l.b16 %v1209
      %v1298 = vunpack.c.h.b16 %v1209
      %v1299 = vunpack.c.l.b16 %v1210
      %v1300 = vunpack.c.h.b16 %v1210
      %v1301 = vunpack.c.l.b16 %v1211
      %v1302 = vunpack.c.h.b16 %v1211
      %v1303 = vunpack.c.l.b16 %v1212
      %v1304 = vunpack.c.h.b16 %v1212
      %v1305 = vunpack.c.l.b16 %v1213
      %v1306 = vunpack.c.h.b16 %v1213
      %v1307 = vunpack.c.l.b16 %v1214
      %v1308 = vunpack.c.h.b16 %v1214
      %v1309 = vunpack.c.l.b16 %v1215
      %v1310 = vunpack.c.h.b16 %v1215
      %v1311 = vunpack.c.l.b16 %v1216
      %v1312 = vunpack.c.h.b16 %v1216
      %v1313 = vpack.c.b16 %v1249, %v1249
      %v1314 = vpack.c.b16 %v1250, %v1250
      %v1315 = vpack.c.b16 %v1251, %v1251
      %v1316 = vpack.c.b16 %v1252, %v1252
      %v1317 = vpack.c.b16 %v1253, %v1253
      %v1318 = vpack.c.b16 %v1254, %v1254
      %v1319 = vpack.c.b16 %v1255, %v1255
      %v1320 = vpack.c.b16 %v1256, %v1256
      %v1321 = vpack.c.b16 %v1257, %v1257
      %v1322 = vpack.c.b16 %v1258, %v1258
      %v1323 = vpack.c.b16 %v1259, %v1259
      %v1324 = vpack.c.b16 %v1260, %v1260
      %v1325 = vpack.c.b16 %v1261, %v1261
      %v1326 = vpack.c.b16 %v1262, %v1262
      %v1327 = vpack.c.b16 %v1263, %v1263
      %v1328 = vpack.c.b16 %v1264, %v1264
      %v1329 = vpack.c.b16 %v1265, %v1265
      %v1330 = vpack.c.b16 %v1266, %v1266
      %v1331 = vpack.c.b16 %v1267, %v1267
      %v1332 = vpack.c.b16 %v1268, %v1268
      %v1333 = vpack.c.b16 %v1269, %v1269
      %v1334 = vpack.c.b16 %v1270, %v1270
      %v1335 = vpack.c.b16 %v1271, %v1271
      %v1336 = vpack.c.b16 %v1272, %v1272
      %v1337 = vpack.c.b16 %v1273, %v1273
      %v1338 = vpack.c.b16 %v1274, %v1274
      %v1339 = vpack.c.b16 %v1275, %v1275
      %v1340 = vpack.c.b16 %v1276, %v1276
      %v1341 = vpack.c.b16 %v1277, %v1277
      %v1342 = vpack.c.b16 %v1278, %v1278
      %v1343 = vpack.c.b16 %v1279, %v1279
      %v1344 = vpack.c.b16 %v1280, %v1280
      %v1345 = vpack.c.b16 %v1281, %v1281
      %v1346 = vpack.c.b16 %v1282, %v1282
      %v1347 = vpack.c.b16 %v1283, %v1283
      %v1348 = vpack.c.b16 %v1284, %v1284
      %v1349 = vpack.c.b16 %v1285, %v1285
      %v1350 = vpack.c.b16 %v1286, %v1286
      %v1351 = vpack.c.b16 %v1287, %v1287
      %v1352 = vpack.c.b16 %v1288, %v1288
      %v1353 = vpack.c.b16 %v1289, %v1289
      %v1354 = vpack.c.b16 %v1290, %v1290
      %v1355 = vpack.c.b16 %v1291, %v1291
      %v1356 = vpack.c.b16 %v1292, %v1292
      %v1357 = vpack.c.b16 %v1293, %v1293
      %v1358 = vpack.c.b16 %v1294, %v1294
      %v1359 = vpack.c.b16 %v1295, %v1295
      %v1360 = vpack.c.b16 %v1296, %v1296
      %v1361 = vpack.c.b16 %v1297, %v1297
      %v1362 = vpack.c.b16 %v1298, %v1298
      %v1363 = vpack.c.b16 %v1299, %v1299
      %v1364 = vpack.c.b16 %v1300, %v1300
      %v1365 = vpack.c.b16 %v1301, %v1301
      %v1366 = vpack.c.b16 %v1302, %v1302
      %v1367 = vpack.c.b16 %v1303, %v1303
      %v1368 = vpack.c.b16 %v1304, %v1304
      %v1369 = vpack.c.b16 %v1305, %v1305
      %v1370 = vpack.c.b16 %v1306, %v1306
      %v1371 = vpack.c.b16 %v1307, %v1307
      %v1372 = vpack.c.b16 %v1308, %v1308
      %v1373 = vpack.c.b16 %v1309, %v1309
      %v1374 = vpack.c.b16 %v1310, %v1310
      %v1375 = vpack.c.b16 %v1311, %v1311
      %v1376 = vpack.c.b16 %v1312, %v1312
      %vm1441 = vcmask 125952
      %1442 = vst.msk [vmem:[%s223] sm:$0xf] %vm1441, %v1313
      %1443 = vst.msk [vmem:[%s223 + $0x4] sm:$0xf] %vm1441, %v1314
      %1444 = vst.msk [vmem:[%s223 + $0x8] sm:$0xf] %vm1441, %v1315
      %1445 = vst.msk [vmem:[%s223 + $0xc] sm:$0xf] %vm1441, %v1316
      %1446 = vst.msk [vmem:[%s223 + $0x10] sm:$0xf] %vm1441, %v1317
      %1447 = vst.msk [vmem:[%s223 + $0x14] sm:$0xf] %vm1441, %v1318
      %1448 = vst.msk [vmem:[%s223 + $0x18] sm:$0xf] %vm1441, %v1319
      %1449 = vst.msk [vmem:[%s223 + $0x1c] sm:$0xf] %vm1441, %v1320
      %1450 = vst.msk [vmem:[%s223 + $0x20] sm:$0xf] %vm1441, %v1321
      %1451 = vst.msk [vmem:[%s223 + $0x24] sm:$0xf] %vm1441, %v1322
      %1452 = vst.msk [vmem:[%s223 + $0x28] sm:$0xf] %vm1441, %v1323
      %1453 = vst.msk [vmem:[%s223 + $0x2c] sm:$0xf] %vm1441, %v1324
      %1454 = vst.msk [vmem:[%s223 + $0x30] sm:$0xf] %vm1441, %v1325
      %1455 = vst.msk [vmem:[%s223 + $0x34] sm:$0xf] %vm1441, %v1326
      %1456 = vst.msk [vmem:[%s223 + $0x38] sm:$0xf] %vm1441, %v1327
      %1457 = vst.msk [vmem:[%s223 + $0x3c] sm:$0xf] %vm1441, %v1328
      %1458 = vst.msk [vmem:[%s223 + $0x40] sm:$0xf] %vm1441, %v1329
      %1459 = vst.msk [vmem:[%s223 + $0x44] sm:$0xf] %vm1441, %v1330
      %1460 = vst.msk [vmem:[%s223 + $0x48] sm:$0xf] %vm1441, %v1331
      %1461 = vst.msk [vmem:[%s223 + $0x4c] sm:$0xf] %vm1441, %v1332
      %1462 = vst.msk [vmem:[%s223 + $0x50] sm:$0xf] %vm1441, %v1333
      %1463 = vst.msk [vmem:[%s223 + $0x54] sm:$0xf] %vm1441, %v1334
      %1464 = vst.msk [vmem:[%s223 + $0x58] sm:$0xf] %vm1441, %v1335
      %1465 = vst.msk [vmem:[%s223 + $0x5c] sm:$0xf] %vm1441, %v1336
      %1466 = vst.msk [vmem:[%s223 + $0x60] sm:$0xf] %vm1441, %v1337
      %1467 = vst.msk [vmem:[%s223 + $0x64] sm:$0xf] %vm1441, %v1338
      %1468 = vst.msk [vmem:[%s223 + $0x68] sm:$0xf] %vm1441, %v1339
      %1469 = vst.msk [vmem:[%s223 + $0x6c] sm:$0xf] %vm1441, %v1340
      %1470 = vst.msk [vmem:[%s223 + $0x70] sm:$0xf] %vm1441, %v1341
      %1471 = vst.msk [vmem:[%s223 + $0x74] sm:$0xf] %vm1441, %v1342
      %1472 = vst.msk [vmem:[%s223 + $0x78] sm:$0xf] %vm1441, %v1343
      %1473 = vst.msk [vmem:[%s223 + $0x7c] sm:$0xf] %vm1441, %v1344
      %1474 = vst.msk [vmem:[%s223 + $0x80] sm:$0xf] %vm1441, %v1345
      %1475 = vst.msk [vmem:[%s223 + $0x84] sm:$0xf] %vm1441, %v1346
      %1476 = vst.msk [vmem:[%s223 + $0x88] sm:$0xf] %vm1441, %v1347
      %1477 = vst.msk [vmem:[%s223 + $0x8c] sm:$0xf] %vm1441, %v1348
      %1478 = vst.msk [vmem:[%s223 + $0x90] sm:$0xf] %vm1441, %v1349
      %1479 = vst.msk [vmem:[%s223 + $0x94] sm:$0xf] %vm1441, %v1350
      %1480 = vst.msk [vmem:[%s223 + $0x98] sm:$0xf] %vm1441, %v1351
      %1481 = vst.msk [vmem:[%s223 + $0x9c] sm:$0xf] %vm1441, %v1352
      %1482 = vst.msk [vmem:[%s223 + $0xa0] sm:$0xf] %vm1441, %v1353
      %1483 = vst.msk [vmem:[%s223 + $0xa4] sm:$0xf] %vm1441, %v1354
      %1484 = vst.msk [vmem:[%s223 + $0xa8] sm:$0xf] %vm1441, %v1355
      %1485 = vst.msk [vmem:[%s223 + $0xac] sm:$0xf] %vm1441, %v1356
      %1486 = vst.msk [vmem:[%s223 + $0xb0] sm:$0xf] %vm1441, %v1357
      %1487 = vst.msk [vmem:[%s223 + $0xb4] sm:$0xf] %vm1441, %v1358
      %1488 = vst.msk [vmem:[%s223 + $0xb8] sm:$0xf] %vm1441, %v1359
      %1489 = vst.msk [vmem:[%s223 + $0xbc] sm:$0xf] %vm1441, %v1360
      %1490 = vst.msk [vmem:[%s223 + $0xc0] sm:$0xf] %vm1441, %v1361
      %1491 = vst.msk [vmem:[%s223 + $0xc4] sm:$0xf] %vm1441, %v1362
      %1492 = vst.msk [vmem:[%s223 + $0xc8] sm:$0xf] %vm1441, %v1363
      %1493 = vst.msk [vmem:[%s223 + $0xcc] sm:$0xf] %vm1441, %v1364
      %1494 = vst.msk [vmem:[%s223 + $0xd0] sm:$0xf] %vm1441, %v1365
      %1495 = vst.msk [vmem:[%s223 + $0xd4] sm:$0xf] %vm1441, %v1366
      %1496 = vst.msk [vmem:[%s223 + $0xd8] sm:$0xf] %vm1441, %v1367
      %1497 = vst.msk [vmem:[%s223 + $0xdc] sm:$0xf] %vm1441, %v1368
      %1498 = vst.msk [vmem:[%s223 + $0xe0] sm:$0xf] %vm1441, %v1369
      %1499 = vst.msk [vmem:[%s223 + $0xe4] sm:$0xf] %vm1441, %v1370
      %1500 = vst.msk [vmem:[%s223 + $0xe8] sm:$0xf] %vm1441, %v1371
      %1501 = vst.msk [vmem:[%s223 + $0xec] sm:$0xf] %vm1441, %v1372
      %1502 = vst.msk [vmem:[%s223 + $0xf0] sm:$0xf] %vm1441, %v1373
      %1503 = vst.msk [vmem:[%s223 + $0xf4] sm:$0xf] %vm1441, %v1374
      %1504 = vst.msk [vmem:[%s223 + $0xf8] sm:$0xf] %vm1441, %v1375
      %1505 = vst.msk [vmem:[%s223 + $0xfc] sm:$0xf] %vm1441, %v1376
      %s1506 = smul.u32 64, %s18
      %p1507 = scmp.lt.s32.totalorder %s1506, 255
      %s1508 = scalar_select %p1507, %s1506, 255
      %p1509 = scmp.lt.s32.totalorder %s19, 0
      %s1510 = scalar_select %p1509, %s19, 0
      %s1511 = sadd.s32 %s1510, %s1508
      %s1512 = smul.addr %s1511, 4
      %s1513 = scalar_lea.vmem %s3, %s1512
      // Predicated region
      $region33: #{gemm_bias_act.1} parent=31 // pred_check
        %p1514 = pneg %p124
      $region34: #{gemm_bias_act.1} parent=31 // pred_check_branch
        %1516 = sbr.rel (%p1514) target = $region36
      $region35: #{gemm_bias_act.1} parent=31 // pred_region
        %s1517 = smul.u32 64, %s18
      $region36: #{gemm_bias_act.1} parent=31 // pred_fallthru
        _
    $region32: #{gemm_bias_act.1} parent=5 // pred_fallthru
      _
    %p1518 = scmp.le.s32.totalorder 2, %s9
    // Predicated region
    $region37: #{gemm_bias_act.1} parent=5 // pred_check
      %p1519 = pneg %p1518
    $region38: #{gemm_bias_act.1} parent=5 // pred_check_branch
      %1521 = sbr.rel (%p1519) target = $region40
    $region39: #{gemm_bias_act.1} parent=5 // pred_region
      %s1522 = ssub.s32 %s9, 2
      // Predicated region
      $region41: #{gemm_bias_act.1} parent=39 // pred_check
        %p1523 = pneg %p130
      $region42: #{gemm_bias_act.1} parent=39 // pred_check_branch
        %1525 = sbr.rel (%p1523) target = $region44
      $region43: #{gemm_bias_act.1} parent=39 // pred_region
        %s1526 = smul.u32 64, %s20
        %p1527 = scmp.lt.s32.totalorder %s1526, 255
        %s1528 = scalar_select %p1527, %s1526, 255
        %p1529 = scmp.lt.s32.totalorder %s21, 0
        %s1530 = scalar_select %p1529, %s21, 0
        %s1531 = sadd.s32 %s1530, %s1528
        %s1532 = smul.addr %s1531, 4
        %s1533 = scalar_lea.vmem %s3, %s1532
      $region44: #{gemm_bias_act.1} parent=39 // pred_fallthru
        _
    $region40: #{gemm_bias_act.1} parent=5 // pred_fallthru
      _
  $region6: #{gemm_bias_act.1} parent=0 // loop_footer
    %s13 = sadd.s32 1, %s9
  $region7: #{gemm_bias_act.1} parent=0 // loop_footer_branch
    %8 = sbr.rel target = $region3
  $region8: #{gemm_bias_act.1} parent=0 // loop_exit
    _

</llo_original>
